<compile_context>
chip_gen: v7x
topology: tpu7x:2x2x1
jax: 0.10.0
libtpu: 0.0.40
codegen_flags: <defaults>
</compile_context>

<pallas_src>
import functools

import jax
import jax.numpy as jnp
from jax.experimental import pallas as pl
from jax.experimental.pallas import tpu as pltpu

BN_EPS = 1e-5
C_OUT = 64                # fixed by the module (Conv1d out_channels=64)
MAX_CONV_UNROLL = 16      # max samples statically unrolled per conv grid step


def _vmem_limit_bytes():
    """~75% of physical VMEM, capped at 96MiB (big tiles on v5e/v6e, fits v7x's 64MiB)."""
    try:
        cap = int(pltpu.get_tpu_info().vmem_capacity_bytes)
        return int(min(cap * 3 // 4, 96 * 1024 * 1024))
    except Exception:
        return 48 * 1024 * 1024   # conservative fallback: safe on v5e / v6e / v7x


# ----------------------------------------------------------------------------------
# Kernel 1: batch-tiled conv (per-tap accumulated matmuls) + per-tile BN statistics
# ----------------------------------------------------------------------------------
def conv_stats_kernel(x_ref, w_ref, conv_ref, sum_ref, ssq_ref, *, k, stride, l_out):
    # x_ref: (Bt, L, C_in) bf16;  w_ref: (k, C_in, C_out) bf16
    bt, _, c_in = x_ref.shape
    c_out = w_ref.shape[2]
    span = (l_out - 1) * stride + 1
    sums = jnp.zeros((1, c_out), jnp.float32)
    ssqs = jnp.zeros((1, c_out), jnp.float32)
    for b in range(bt):                           # static unroll over the batch tile
        x = x_ref[b]                              # (L, C_in) bf16 -- no f32 round trip
        acc = jnp.zeros((l_out, c_out), jnp.float32)
        for j in range(k):                        # k is tiny -> static unrolled taps
            xj = jax.lax.slice(x, (j, 0), (j + span, c_in), (stride, 1))
            acc = acc + jnp.dot(xj, w_ref[j], preferred_element_type=jnp.float32)
        # NOTE: conv bias intentionally omitted -- a per-channel constant before
        # training-mode BN is exactly cancelled by the mean subtraction.
        conv_ref[b] = acc.astype(conv_ref.dtype)
        sums = sums + jnp.sum(acc, axis=0, keepdims=True)
        ssqs = ssqs + jnp.sum(acc * acc, axis=0, keepdims=True)
    # One partial-stat write per tile; reduced to exact global BN stats outside.
    sum_ref[0] = sums
    ssq_ref[0] = ssqs


# ----------------------------------------------------------------------------------
# Kernel 2: fused BN-FMA + ReLU + Linear; batch-parallel x F_in-reduction grid
# ----------------------------------------------------------------------------------
def fc_fused_kernel(xf_ref, scale_ref, shift_ref, w_ref, b_ref, out_ref):
    kk = pl.program_id(1)

    @pl.when(kk == 0)
    def _init():
        # out block is f32 and its block index is constant across the reduction axis,
        # so it stays resident: seed it with the broadcast bias, accumulate in place.
        out_ref[...] = jnp.broadcast_to(b_ref[...], out_ref.shape)

    # Folded BatchNorm (single per-element FMA) + ReLU epilogue, then bf16 MXU matmul
    # with f32 accumulation.  (On v5e, if this epilogue ever becomes VALU-bound for a
    # narrow U, fold the positive per-channel scale into the FC weight columns.)
    a = xf_ref[...].astype(jnp.float32) * scale_ref[...] + shift_ref[...]
    a = jnp.maximum(a, 0.0)
    out_ref[...] += jnp.dot(a.astype(w_ref.dtype), w_ref[...],
                            preferred_element_type=jnp.float32)


# ----------------------------------------------------------------------------------
# Tile pickers (static, shape-driven)
# ----------------------------------------------------------------------------------
def _pick_conv_batch_tile(batch, l, c_in, l_out, c_out, budget_bytes):
    def step_bytes(bt):
        # double-buffered bf16 input + output blocks (+ small f32 stats/accumulators)
        return 2 * 2 * bt * (l * c_in + l_out * c_out) + 8 * l_out * c_out
    cands = [d for d in range(1, batch + 1)
             if batch % d == 0 and d <= MAX_CONV_UNROLL and step_bytes(d) <= budget_bytes]
    return max(cands) if cands else 1


def _pick_fc_tiles(batch, f_in, units, budget_bytes):
    # Batch-tile candidates: full batch, or multiple-of-8 divisors (2D block rule).
    bt_cands = sorted({batch} | {d for d in range(8, batch, 8) if batch % d == 0},
                      reverse=True)
    # Reduction-tile candidates: 128-multiples dividing F_in, largest first
    # (larger divisors naturally prefer 256-aligned tiles on v6e/v7x when possible).
    if f_in % 128 == 0:
        tk_cands = sorted([t for t in range(128, f_in + 1, 128) if f_in % t == 0],
                          reverse=True)
    else:
        tk_cands = [f_in]
    for tk in tk_cands:               # keep the reduction tile as large as possible ...
        for bt in bt_cands:           # ... and shrink the batch tile first (v7x guidance)
            need = (2 * 2 * (bt * tk + tk * units)   # double-buffered bf16 act + weight
                    + 4 * bt * units                 # resident f32 out block
                    + 2 * 2 * 4 * tk)                # double-buffered f32 scale/shift
            if need <= budget_bytes:
                return bt, tk
    return bt_cands[-1], tk_cands[-1]


# ----------------------------------------------------------------------------------
# Parameters: one-time weight reshuffles hoisted out of the forward pass
# ----------------------------------------------------------------------------------
def init_params(key, in_channels, conv_kernel_size, conv_stride, seq_len, dense_units):
    c_out = C_OUT
    l_out = (seq_len - conv_kernel_size) // conv_stride + 1
    flat_features = c_out * l_out
    k0, k1, k2 = jax.random.split(key, 3)
    conv_bound = 1.0 / jnp.sqrt(in_channels * conv_kernel_size)
    fc_bound = 1.0 / jnp.sqrt(flat_features)

    # torch-layout weights
    w_conv = jax.random.uniform(k0, (c_out, in_channels, conv_kernel_size),
                                jnp.float32, -conv_bound, conv_bound)
    w_fc = jax.random.uniform(k1, (dense_units, flat_features),
                              jnp.float32, -fc_bound, fc_bound)
    b_fc = jax.random.uniform(k2, (dense_units,), jnp.float32, -fc_bound, fc_bound)
    # Conv bias omitted: with training-mode (batch-statistic) BN it is a provable no-op.

    # One-time reshuffles (removed from the per-call forward):
    #  * conv weight as k taps of (C_in, C_out) for the in-kernel accumulated matmuls
    #  * fc weight permuted + transposed so it consumes the natural (B, L_out*C_out)
    #    flatten order -> no HBM transpose between the two kernels.
    w_taps = jnp.transpose(w_conv, (2, 1, 0))                          # (k, C_in, C_out)
    w_fc_nat_t = jnp.transpose(
        w_fc.reshape(dense_units, c_out, l_out), (2, 1, 0)
    ).reshape(flat_features, dense_units)                              # (F_in, U)

    return {
        "w_taps": w_taps,
        "gamma": jnp.ones((c_out,), jnp.float32),
        "beta": jnp.zeros((c_out,), jnp.float32),
        "w_fc_nat_t": w_fc_nat_t,
        "b_fc": b_fc,
    }


# ----------------------------------------------------------------------------------
# Forward pass
# ----------------------------------------------------------------------------------
def conv_dense_block(x, params, *, kernel_size, stride, compute_dtype=jnp.bfloat16):
    B, L, C_in = x.shape
    k, s = kernel_size, stride
    L_out = (L - k) // s + 1

    w_taps = params["w_taps"].astype(compute_dtype)        # (k, C_in, C_out)
    gamma, beta = params["gamma"], params["beta"]
    w_nat = params["w_fc_nat_t"].astype(compute_dtype)     # (F_in, U) natural-order
    b_fc = params["b_fc"]
    C_out = w_taps.shape[2]
    F_in, U = w_nat.shape
    assert F_in == C_out * L_out, (F_in, C_out, L_out)

    vmem_limit = _vmem_limit_bytes()
    tile_budget = vmem_limit // 2       # headroom for Mosaic-internal scratch

    xc = x.astype(compute_dtype)

    # --- pass 1: batch-tiled conv + per-tile BN partial stats ------------------------
    Bt = _pick_conv_batch_tile(B, L, C_in, L_out, C_out, tile_budget)
    n_bt = B // Bt
    conv, sums, ssqs = pl.pallas_call(
        functools.partial(conv_stats_kernel, k=k, stride=s, l_out=L_out),
        out_shape=(
            jax.ShapeDtypeStruct((B, L_out, C_out), compute_dtype),
            jax.ShapeDtypeStruct((n_bt, 1, C_out), jnp.float32),
            jax.ShapeDtypeStruct((n_bt, 1, C_out), jnp.float32),
        ),
        grid=(n_bt,),
        in_specs=[
            pl.BlockSpec((Bt, L, C_in), lambda i: (i, 0, 0)),
            pl.BlockSpec((k, C_in, C_out), lambda i: (0, 0, 0)),
        ],
        out_specs=(
            pl.BlockSpec((Bt, L_out, C_out), lambda i: (i, 0, 0)),
            pl.BlockSpec((1, 1, C_out), lambda i: (i, 0, 0)),
            pl.BlockSpec((1, 1, C_out), lambda i: (i, 0, 0)),
        ),
        compiler_params=pltpu.CompilerParams(
            dimension_semantics=("parallel",),
            vmem_limit_bytes=vmem_limit,
        ),
    )(xc, w_taps)

    # --- tiny glue: exact global BN stats -> folded per-channel scale/shift ----------
    n = B * L_out
    mean = jnp.sum(sums[:, 0, :], axis=0) / n
    ex2 = jnp.sum(ssqs[:, 0, :], axis=0) / n
    var = jnp.maximum(ex2 - mean * mean, 0.0)               # guard against cancellation
    scale = gamma * jax.lax.rsqrt(var + BN_EPS)
    shift = beta - mean * scale
    scale_flat = jnp.tile(scale, L_out).reshape(1, F_in)    # flat index = t*C_out + c
    shift_flat = jnp.tile(shift, L_out).reshape(1, F_in)

    # Natural flatten: free contiguous HBM reshape (the permutation lives in w_fc_nat_t).
    conv_flat = conv.reshape(B, F_in)

    # --- pass 2: fused BN-FMA + ReLU + Linear -----------------------------------------
    Bt2, TK = _pick_fc_tiles(B, F_in, U, tile_budget)
    out = pl.pallas_call(
        fc_fused_kernel,
        out_shape=jax.ShapeDtypeStruct((B, U), jnp.float32),
        grid=(B // Bt2, F_in // TK),             # parallel batch axis, reduction last
        in_specs=[
            pl.BlockSpec((Bt2, TK), lambda b, kk: (b, kk)),
            pl.BlockSpec((1, TK), lambda b, kk: (0, kk)),
            pl.BlockSpec((1, TK), lambda b, kk: (0, kk)),
            # If the weight stream ever shows exposed DMA per reduction step, add
            # pipeline_mode=pl.Buffered(3) here (skip on VMEM-tight v7x configs).
            pl.BlockSpec((TK, U), lambda b, kk: (kk, 0)),
            pl.BlockSpec((1, U), lambda b, kk: (0, 0)),
        ],
        out_specs=pl.BlockSpec((Bt2, U), lambda b, kk: (b, 0)),
        compiler_params=pltpu.CompilerParams(
            dimension_semantics=("parallel", "arbitrary"),
            vmem_limit_bytes=vmem_limit,
        ),
    )(conv_flat, scale_flat, shift_flat, w_nat, b_fc.reshape(1, U))

    # Dropout: eval-mode identity (deterministic).
    return out


if __name__ == "__main__":
    # Small, module-consistent shapes: batch=2, seq_len=16, in_channels=4.
    B, L, C_in = 2, 16, 4
    kernel_size, stride = 3, 1
    dense_units = 32

    key = jax.random.PRNGKey(0)
    kx, kp = jax.random.split(key)
    x = jax.random.normal(kx, (B, L, C_in), jnp.float32)
    params = init_params(kp, C_in, kernel_size, stride, L, dense_units)

    fwd = jax.jit(functools.partial(conv_dense_block,
                                    kernel_size=kernel_size, stride=stride))
    out = fwd(x, params)
    jax.block_until_ready(out)
    assert out.shape == (B, dense_units), out.shape
    print("KERNEL_OK")
</pallas_src>

<mosaic_0001>
module attributes {stable_mosaic.version = 11 : i64} {
  func.func @conv_stats_kernel(%arg0: i32, %arg1: memref<2x16x4xbf16, #tpu.memory_space<vmem>>, %arg2: memref<3x4x64xbf16, #tpu.memory_space<vmem>>, %arg3: memref<2x14x64xbf16, #tpu.memory_space<vmem>>, %arg4: memref<1x1x64xf32, #tpu.memory_space<vmem>>, %arg5: memref<1x1x64xf32, #tpu.memory_space<vmem>>) attributes {dimension_semantics = [#tpu.dimension_semantics<parallel>], iteration_bounds = array<i64: 1>, scalar_prefetch = 0 : i64, scratch_operands = 0 : i64, tpu.core_type = #tpu.core_type<tc>, window_params = [{transform_indices = @transform_0, window_bounds = array<i64: 2, 16, 4>}, {pipeline_mode = #tpu.pipeline_mode<synchronous>, transform_indices = @transform_1, window_bounds = array<i64: 3, 4, 64>}, {transform_indices = @transform_2, window_bounds = array<i64: 2, 14, 64>}, {transform_indices = @transform_3, window_bounds = array<i64: 1, 1, 64>}, {transform_indices = @transform_4, window_bounds = array<i64: 1, 1, 64>}]} {
    %cst = arith.constant 0.000000e+00 : f32
    %0 = vector.broadcast %cst : f32 to vector<1x64xf32>
    %cst_0 = arith.constant 0.000000e+00 : f32
    %1 = vector.broadcast %cst_0 : f32 to vector<1x64xf32>
    %c0 = arith.constant 0 : index
    %c0_1 = arith.constant 0 : index
    %c0_2 = arith.constant 0 : index
    %2 = vector.load %arg1[%c0, %c0_1, %c0_2] : memref<2x16x4xbf16, #tpu.memory_space<vmem>>, vector<1x16x4xbf16>
    %3 = vector.shape_cast %2 : vector<1x16x4xbf16> to vector<16x4xbf16>
    %cst_3 = arith.constant 0.000000e+00 : f32
    %4 = vector.broadcast %cst_3 : f32 to vector<14x64xf32>
    %5 = vector.extract_strided_slice %3 {offsets = [0, 0], sizes = [14, 4], strides = [1, 1]} : vector<16x4xbf16> to vector<14x4xbf16>
    %c0_4 = arith.constant 0 : index
    %c0_5 = arith.constant 0 : index
    %c0_6 = arith.constant 0 : index
    %6 = vector.load %arg2[%c0_4, %c0_5, %c0_6] : memref<3x4x64xbf16, #tpu.memory_space<vmem>>, vector<1x4x64xbf16>
    %7 = vector.shape_cast %6 : vector<1x4x64xbf16> to vector<4x64xbf16>
    %cst_7 = arith.constant dense<0.000000e+00> : vector<14x64xf32>
    %8 = tpu.matmul %5, %7, %cst_7 {dimension_numbers = #tpu.dot_dimension_numbers<[1], [0], [0], [1], [0, 0, 1, 1], [], []>} : vector<14x4xbf16>, vector<4x64xbf16>, vector<14x64xf32> -> vector<14x64xf32>
    %9 = arith.addf %4, %8 : vector<14x64xf32>
    %10 = vector.extract_strided_slice %3 {offsets = [1, 0], sizes = [14, 4], strides = [1, 1]} : vector<16x4xbf16> to vector<14x4xbf16>
    %c1 = arith.constant 1 : index
    %c0_8 = arith.constant 0 : index
    %c0_9 = arith.constant 0 : index
    %11 = vector.load %arg2[%c1, %c0_8, %c0_9] : memref<3x4x64xbf16, #tpu.memory_space<vmem>>, vector<1x4x64xbf16>
    %12 = vector.shape_cast %11 : vector<1x4x64xbf16> to vector<4x64xbf16>
    %cst_10 = arith.constant dense<0.000000e+00> : vector<14x64xf32>
    %13 = tpu.matmul %10, %12, %cst_10 {dimension_numbers = #tpu.dot_dimension_numbers<[1], [0], [0], [1], [0, 0, 1, 1], [], []>} : vector<14x4xbf16>, vector<4x64xbf16>, vector<14x64xf32> -> vector<14x64xf32>
    %14 = arith.addf %9, %13 : vector<14x64xf32>
    %15 = vector.extract_strided_slice %3 {offsets = [2, 0], sizes = [14, 4], strides = [1, 1]} : vector<16x4xbf16> to vector<14x4xbf16>
    %c2 = arith.constant 2 : index
    %c0_11 = arith.constant 0 : index
    %c0_12 = arith.constant 0 : index
    %16 = vector.load %arg2[%c2, %c0_11, %c0_12] : memref<3x4x64xbf16, #tpu.memory_space<vmem>>, vector<1x4x64xbf16>
    %17 = vector.shape_cast %16 : vector<1x4x64xbf16> to vector<4x64xbf16>
    %cst_13 = arith.constant dense<0.000000e+00> : vector<14x64xf32>
    %18 = tpu.matmul %15, %17, %cst_13 {dimension_numbers = #tpu.dot_dimension_numbers<[1], [0], [0], [1], [0, 0, 1, 1], [], []>} : vector<14x4xbf16>, vector<4x64xbf16>, vector<14x64xf32> -> vector<14x64xf32>
    %19 = arith.addf %14, %18 : vector<14x64xf32>
    %20 = arith.truncf %19 : vector<14x64xf32> to vector<14x64xbf16>
    %c0_14 = arith.constant 0 : index
    %c0_15 = arith.constant 0 : index
    %c0_16 = arith.constant 0 : index
    %21 = vector.load %arg3[%c0_14, %c0_15, %c0_16] : memref<2x14x64xbf16, #tpu.memory_space<vmem>>, vector<1x14x64xbf16>
    %22 = vector.shape_cast %21 : vector<1x14x64xbf16> to vector<14x64xbf16>
    %23 = vector.shape_cast %20 : vector<14x64xbf16> to vector<1x14x64xbf16>
    tpu.vector_store %arg3[%c0_14, %c0_15, %c0_16], %23 {strides = array<i32>} : memref<2x14x64xbf16, #tpu.memory_space<vmem>>, vector<1x14x64xbf16>,
    %cst_17 = arith.constant dense<0.000000e+00> : vector<64xf32>
    %24 = vector.multi_reduction <add>, %19, %cst_17 [0] : vector<14x64xf32> to vector<64xf32>
    %25 = vector.shape_cast %24 : vector<64xf32> to vector<1x64xf32>
    %26 = arith.addf %0, %25 : vector<1x64xf32>
    %27 = arith.mulf %19, %19 : vector<14x64xf32>
    %cst_18 = arith.constant dense<0.000000e+00> : vector<64xf32>
    %28 = vector.multi_reduction <add>, %27, %cst_18 [0] : vector<14x64xf32> to vector<64xf32>
    %29 = vector.shape_cast %28 : vector<64xf32> to vector<1x64xf32>
    %30 = arith.addf %1, %29 : vector<1x64xf32>
    %c1_19 = arith.constant 1 : index
    %c0_20 = arith.constant 0 : index
    %c0_21 = arith.constant 0 : index
    %31 = vector.load %arg1[%c1_19, %c0_20, %c0_21] : memref<2x16x4xbf16, #tpu.memory_space<vmem>>, vector<1x16x4xbf16>
    %32 = vector.shape_cast %31 : vector<1x16x4xbf16> to vector<16x4xbf16>
    %cst_22 = arith.constant 0.000000e+00 : f32
    %33 = vector.broadcast %cst_22 : f32 to vector<14x64xf32>
    %34 = vector.extract_strided_slice %32 {offsets = [0, 0], sizes = [14, 4], strides = [1, 1]} : vector<16x4xbf16> to vector<14x4xbf16>
    %c0_23 = arith.constant 0 : index
    %c0_24 = arith.constant 0 : index
    %c0_25 = arith.constant 0 : index
    %35 = vector.load %arg2[%c0_23, %c0_24, %c0_25] : memref<3x4x64xbf16, #tpu.memory_space<vmem>>, vector<1x4x64xbf16>
    %36 = vector.shape_cast %35 : vector<1x4x64xbf16> to vector<4x64xbf16>
    %cst_26 = arith.constant dense<0.000000e+00> : vector<14x64xf32>
    %37 = tpu.matmul %34, %36, %cst_26 {dimension_numbers = #tpu.dot_dimension_numbers<[1], [0], [0], [1], [0, 0, 1, 1], [], []>} : vector<14x4xbf16>, vector<4x64xbf16>, vector<14x64xf32> -> vector<14x64xf32>
    %38 = arith.addf %33, %37 : vector<14x64xf32>
    %39 = vector.extract_strided_slice %32 {offsets = [1, 0], sizes = [14, 4], strides = [1, 1]} : vector<16x4xbf16> to vector<14x4xbf16>
    %c1_27 = arith.constant 1 : index
    %c0_28 = arith.constant 0 : index
    %c0_29 = arith.constant 0 : index
    %40 = vector.load %arg2[%c1_27, %c0_28, %c0_29] : memref<3x4x64xbf16, #tpu.memory_space<vmem>>, vector<1x4x64xbf16>
    %41 = vector.shape_cast %40 : vector<1x4x64xbf16> to vector<4x64xbf16>
    %cst_30 = arith.constant dense<0.000000e+00> : vector<14x64xf32>
    %42 = tpu.matmul %39, %41, %cst_30 {dimension_numbers = #tpu.dot_dimension_numbers<[1], [0], [0], [1], [0, 0, 1, 1], [], []>} : vector<14x4xbf16>, vector<4x64xbf16>, vector<14x64xf32> -> vector<14x64xf32>
    %43 = arith.addf %38, %42 : vector<14x64xf32>
    %44 = vector.extract_strided_slice %32 {offsets = [2, 0], sizes = [14, 4], strides = [1, 1]} : vector<16x4xbf16> to vector<14x4xbf16>
    %c2_31 = arith.constant 2 : index
    %c0_32 = arith.constant 0 : index
    %c0_33 = arith.constant 0 : index
    %45 = vector.load %arg2[%c2_31, %c0_32, %c0_33] : memref<3x4x64xbf16, #tpu.memory_space<vmem>>, vector<1x4x64xbf16>
    %46 = vector.shape_cast %45 : vector<1x4x64xbf16> to vector<4x64xbf16>
    %cst_34 = arith.constant dense<0.000000e+00> : vector<14x64xf32>
    %47 = tpu.matmul %44, %46, %cst_34 {dimension_numbers = #tpu.dot_dimension_numbers<[1], [0], [0], [1], [0, 0, 1, 1], [], []>} : vector<14x4xbf16>, vector<4x64xbf16>, vector<14x64xf32> -> vector<14x64xf32>
    %48 = arith.addf %43, %47 : vector<14x64xf32>
    %49 = arith.truncf %48 : vector<14x64xf32> to vector<14x64xbf16>
    %c1_35 = arith.constant 1 : index
    %c0_36 = arith.constant 0 : index
    %c0_37 = arith.constant 0 : index
    %50 = vector.load %arg3[%c1_35, %c0_36, %c0_37] : memref<2x14x64xbf16, #tpu.memory_space<vmem>>, vector<1x14x64xbf16>
    %51 = vector.shape_cast %50 : vector<1x14x64xbf16> to vector<14x64xbf16>
    %52 = vector.shape_cast %49 : vector<14x64xbf16> to vector<1x14x64xbf16>
    tpu.vector_store %arg3[%c1_35, %c0_36, %c0_37], %52 {strides = array<i32>} : memref<2x14x64xbf16, #tpu.memory_space<vmem>>, vector<1x14x64xbf16>,
    %cst_38 = arith.constant dense<0.000000e+00> : vector<64xf32>
    %53 = vector.multi_reduction <add>, %48, %cst_38 [0] : vector<14x64xf32> to vector<64xf32>
    %54 = vector.shape_cast %53 : vector<64xf32> to vector<1x64xf32>
    %55 = arith.addf %26, %54 : vector<1x64xf32>
    %56 = arith.mulf %48, %48 : vector<14x64xf32>
    %cst_39 = arith.constant dense<0.000000e+00> : vector<64xf32>
    %57 = vector.multi_reduction <add>, %56, %cst_39 [0] : vector<14x64xf32> to vector<64xf32>
    %58 = vector.shape_cast %57 : vector<64xf32> to vector<1x64xf32>
    %59 = arith.addf %30, %58 : vector<1x64xf32>
    %c0_40 = arith.constant 0 : index
    %c0_41 = arith.constant 0 : index
    %c0_42 = arith.constant 0 : index
    %60 = vector.load %arg4[%c0_40, %c0_41, %c0_42] : memref<1x1x64xf32, #tpu.memory_space<vmem>>, vector<1x1x64xf32>
    %61 = vector.shape_cast %60 : vector<1x1x64xf32> to vector<1x64xf32>
    %62 = vector.shape_cast %55 : vector<1x64xf32> to vector<1x1x64xf32>
    tpu.vector_store %arg4[%c0_40, %c0_41, %c0_42], %62 {strides = array<i32>} : memref<1x1x64xf32, #tpu.memory_space<vmem>>, vector<1x1x64xf32>,
    %c0_43 = arith.constant 0 : index
    %c0_44 = arith.constant 0 : index
    %c0_45 = arith.constant 0 : index
    %63 = vector.load %arg5[%c0_43, %c0_44, %c0_45] : memref<1x1x64xf32, #tpu.memory_space<vmem>>, vector<1x1x64xf32>
    %64 = vector.shape_cast %63 : vector<1x1x64xf32> to vector<1x64xf32>
    %65 = vector.shape_cast %59 : vector<1x64xf32> to vector<1x1x64xf32>
    tpu.vector_store %arg5[%c0_43, %c0_44, %c0_45], %65 {strides = array<i32>} : memref<1x1x64xf32, #tpu.memory_space<vmem>>, vector<1x1x64xf32>,
    return
  }
  func.func @transform_0(%arg0: i32) -> (i32, i32, i32) {
    %c0_i32 = arith.constant 0 : i32
    %c0_i32_0 = arith.constant 0 : i32
    %c0_i32_1 = arith.constant 0 : i32
    return %arg0, %c0_i32, %c0_i32_0 : i32, i32, i32
  }
  func.func @transform_1(%arg0: i32) -> (i32, i32, i32) {
    %c0_i32 = arith.constant 0 : i32
    %c0_i32_0 = arith.constant 0 : i32
    %c0_i32_1 = arith.constant 0 : i32
    %c0_i32_2 = arith.constant 0 : i32
    return %c0_i32, %c0_i32_0, %c0_i32_1 : i32, i32, i32
  }
  func.func @transform_2(%arg0: i32) -> (i32, i32, i32) {
    %c0_i32 = arith.constant 0 : i32
    %c0_i32_0 = arith.constant 0 : i32
    %c0_i32_1 = arith.constant 0 : i32
    return %arg0, %c0_i32, %c0_i32_0 : i32, i32, i32
  }
  func.func @transform_3(%arg0: i32) -> (i32, i32, i32) {
    %c0_i32 = arith.constant 0 : i32
    %c0_i32_0 = arith.constant 0 : i32
    %c0_i32_1 = arith.constant 0 : i32
    return %arg0, %c0_i32, %c0_i32_0 : i32, i32, i32
  }
  func.func @transform_4(%arg0: i32) -> (i32, i32, i32) {
    %c0_i32 = arith.constant 0 : i32
    %c0_i32_0 = arith.constant 0 : i32
    %c0_i32_1 = arith.constant 0 : i32
    return %arg0, %c0_i32, %c0_i32_0 : i32, i32, i32
  }
}

module attributes {stable_mosaic.version = 11 : i64} {
  func.func @fc_fused_kernel(%arg0: i32, %arg1: i32, %arg2: memref<2x896xbf16, #tpu.memory_space<vmem>>, %arg3: memref<1x896xf32, #tpu.memory_space<vmem>>, %arg4: memref<1x896xf32, #tpu.memory_space<vmem>>, %arg5: memref<896x32xbf16, #tpu.memory_space<vmem>>, %arg6: memref<1x32xf32, #tpu.memory_space<vmem>>, %arg7: memref<2x32xf32, #tpu.memory_space<vmem>>) attributes {dimension_semantics = [#tpu.dimension_semantics<parallel>, #tpu.dimension_semantics<arbitrary>], iteration_bounds = array<i64: 1, 1>, scalar_prefetch = 0 : i64, scratch_operands = 0 : i64, tpu.core_type = #tpu.core_type<tc>, window_params = [{transform_indices = @transform_0, window_bounds = array<i64: 2, 896>}, {transform_indices = @transform_1, window_bounds = array<i64: 1, 896>}, {transform_indices = @transform_2, window_bounds = array<i64: 1, 896>}, {transform_indices = @transform_3, window_bounds = array<i64: 896, 32>}, {pipeline_mode = #tpu.pipeline_mode<synchronous>, transform_indices = @transform_4, window_bounds = array<i64: 1, 32>}, {transform_indices = @transform_5, window_bounds = array<i64: 2, 32>}]} {
    %c0_i32 = arith.constant 0 : i32
    %0 = arith.cmpi eq, %arg1, %c0_i32 : i32
    %1 = arith.extui %0 : i1 to i32
    %c0_i32_0 = arith.constant 0 : i32
    %2 = arith.cmpi ne, %1, %c0_i32_0 : i32
    scf.if %2 {
      %c0_13 = arith.constant 0 : index
      %c0_14 = arith.constant 0 : index
      %19 = vector.load %arg6[%c0_13, %c0_14] : memref<1x32xf32, #tpu.memory_space<vmem>>, vector<1x32xf32>
      %20 = vector.shape_cast %19 : vector<1x32xf32> to vector<1x32xf32>
      %21 = vector.broadcast %20 : vector<1x32xf32> to vector<2x32xf32>
      %c0_15 = arith.constant 0 : index
      %c0_16 = arith.constant 0 : index
      %22 = vector.load %arg7[%c0_15, %c0_16] : memref<2x32xf32, #tpu.memory_space<vmem>>, vector<2x32xf32>
      tpu.vector_store %arg7[%c0_15, %c0_16], %21 {strides = array<i32>} : memref<2x32xf32, #tpu.memory_space<vmem>>, vector<2x32xf32>,
    } else {
    }
    %c0 = arith.constant 0 : index
    %c0_1 = arith.constant 0 : index
    %3 = vector.load %arg2[%c0, %c0_1] : memref<2x896xbf16, #tpu.memory_space<vmem>>, vector<2x896xbf16>
    %4 = arith.extf %3 : vector<2x896xbf16> to vector<2x896xf32>
    %c0_2 = arith.constant 0 : index
    %c0_3 = arith.constant 0 : index
    %5 = vector.load %arg3[%c0_2, %c0_3] : memref<1x896xf32, #tpu.memory_space<vmem>>, vector<1x896xf32>
    %6 = vector.broadcast %5 : vector<1x896xf32> to vector<2x896xf32>
    %7 = arith.mulf %4, %6 : vector<2x896xf32>
    %c0_4 = arith.constant 0 : index
    %c0_5 = arith.constant 0 : index
    %8 = vector.load %arg4[%c0_4, %c0_5] : memref<1x896xf32, #tpu.memory_space<vmem>>, vector<1x896xf32>
    %9 = vector.broadcast %8 : vector<1x896xf32> to vector<2x896xf32>
    %10 = arith.addf %7, %9 : vector<2x896xf32>
    %cst = arith.constant 0.000000e+00 : f32
    %11 = vector.broadcast %cst : f32 to vector<2x896xf32>
    %12 = arith.maximumf %10, %11 : vector<2x896xf32>
    %c0_6 = arith.constant 0 : index
    %c0_7 = arith.constant 0 : index
    %13 = vector.load %arg7[%c0_6, %c0_7] : memref<2x32xf32, #tpu.memory_space<vmem>>, vector<2x32xf32>
    %14 = arith.truncf %12 : vector<2x896xf32> to vector<2x896xbf16>
    %c0_8 = arith.constant 0 : index
    %c0_9 = arith.constant 0 : index
    %15 = vector.load %arg5[%c0_8, %c0_9] : memref<896x32xbf16, #tpu.memory_space<vmem>>, vector<896x32xbf16>
    %cst_10 = arith.constant dense<0.000000e+00> : vector<2x32xf32>
    %16 = tpu.matmul %14, %15, %cst_10 {dimension_numbers = #tpu.dot_dimension_numbers<[1], [0], [0], [1], [0, 0, 1, 1], [], []>} : vector<2x896xbf16>, vector<896x32xbf16>, vector<2x32xf32> -> vector<2x32xf32>
    %17 = arith.addf %13, %16 : vector<2x32xf32>
    %c0_11 = arith.constant 0 : index
    %c0_12 = arith.constant 0 : index
    %18 = vector.load %arg7[%c0_11, %c0_12] : memref<2x32xf32, #tpu.memory_space<vmem>>, vector<2x32xf32>
    tpu.vector_store %arg7[%c0_11, %c0_12], %17 {strides = array<i32>} : memref<2x32xf32, #tpu.memory_space<vmem>>, vector<2x32xf32>,
    return
  }
  func.func @transform_0(%arg0: i32, %arg1: i32) -> (i32, i32) {
    %c0_i32 = arith.constant 0 : i32
    return %arg0, %arg1 : i32, i32
  }
  func.func @transform_1(%arg0: i32, %arg1: i32) -> (i32, i32) {
    %c0_i32 = arith.constant 0 : i32
    %c0_i32_0 = arith.constant 0 : i32
    return %c0_i32, %arg1 : i32, i32
  }
  func.func @transform_2(%arg0: i32, %arg1: i32) -> (i32, i32) {
    %c0_i32 = arith.constant 0 : i32
    %c0_i32_0 = arith.constant 0 : i32
    return %c0_i32, %arg1 : i32, i32
  }
  func.func @transform_3(%arg0: i32, %arg1: i32) -> (i32, i32) {
    %c0_i32 = arith.constant 0 : i32
    %c0_i32_0 = arith.constant 0 : i32
    return %arg1, %c0_i32 : i32, i32
  }
  func.func @transform_4(%arg0: i32, %arg1: i32) -> (i32, i32) {
    %c0_i32 = arith.constant 0 : i32
    %c0_i32_0 = arith.constant 0 : i32
    %c0_i32_1 = arith.constant 0 : i32
    return %c0_i32, %c0_i32_0 : i32, i32
  }
  func.func @transform_5(%arg0: i32, %arg1: i32) -> (i32, i32) {
    %c0_i32 = arith.constant 0 : i32
    %c0_i32_0 = arith.constant 0 : i32
    return %arg0, %c0_i32 : i32, i32
  }
}

</mosaic_0001>

<llo_original>
// kernel: tile.18
$region0: #{tile.18}
  #allocation0 [shape = 's32[1]{0}', space=sflag, size = 0x4, scoped, tag = 'scoped memory for tile.18']
  %s0 = inlined_call_operand.vmem [shape: f32[64], index: 0, kind: input, shape index: {}]
  %s1 = inlined_call_operand.vmem [shape: f32[14,64], index: 1, kind: output, shape index: {}]
  // Predicated region
  $region2: #{tile.18} parent=0 // pred_check
    _
  $region3: #{tile.18} parent=0 // pred_check_branch
    %3 = sbr.rel (0) target = $region5
  $region4: #{tile.18} parent=0 // pred_region
    _
  $region5: #{tile.18} parent=0 // pred_fallthru
    _
  %v4 = vld [vmem:[%s0] ss:$0 sm:$0xff]
  %5 = vst [vmem:[%s1] sm:$0xff] %v4
  %s6 = scalar_lea.vmem %s1, 8
  %7 = vst [vmem:[%s6] sm:$0xff] %v4

// kernel: tile.19
$region0: #{tile.19}
  %s0 = inlined_call_operand.vmem [shape: f32[14,64], index: 0, kind: input, shape index: {}]
  %s1 = inlined_call_operand.vmem [shape: f32[1,896], index: 1, kind: output, shape index: {}]
  $region1: #{tile.19} parent=0
    #allocation0 [shape = 'u8[28672]{0}', space=vmem, size = 0x7000, scoped, tag = 'scoped mem for output reshape']
    %v2 = vld [vmem:[%s0] ss:$2 sm:$0x7f]
    %vm3 = vcmask 523264
    %4 = vst.msk [vmem:[#allocation0] ss:$8 sm:$0xf] %vm3, %v2
    %5 = vst.msk [vmem:[#allocation0] ss:$8 sm:$0x70] %vm3, %v2
    %s6 = scalar_lea.vmem %s0, 1
    %v7 = vld [vmem:[%s6] ss:$2 sm:$0x7f]
    %8 = vrot.lane.b32.xlu0 %v7, 64
    %v9 = vpop.permute.xlu0 %8
    %vm10 = vcmask 1048064
    %11 = vst.msk [vmem:[#allocation0] ss:$8 sm:$0xf] %vm10, %v9
    %12 = vst.msk [vmem:[#allocation0] ss:$8 sm:$0x70] %vm10, %v9
    %s14 = sshllo.u32 0, 1
    %v16 = vld [vmem:[#allocation0] sm:%s14]
    %s17 = sshllo.u32 0, 1
    %18 = vst [vmem:[%s1] sm:%s17] %v16
    %s19 = scalar_lea.vmem [#allocation0], 8
    %v20 = vld [vmem:[%s19] sm:%s14]
    %s21 = sshllo.u32 0, 1
    %s22 = scalar_lea.vmem %s1, 1
    %23 = vst [vmem:[%s22] sm:%s21] %v20
    %s24 = scalar_lea.vmem [#allocation0], 16
    %v25 = vld [vmem:[%s24] sm:%s14]
    %s26 = sshllo.u32 0, 1
    %s27 = smul.addr 1, 2
    %s28 = scalar_lea.vmem %s1, %s27
    %29 = vst [vmem:[%s28] sm:%s26] %v25
    %s30 = scalar_lea.vmem [#allocation0], 24
    %v31 = vld [vmem:[%s30] sm:%s14]
    %s32 = sshllo.u32 0, 1
    %s33 = smul.addr 1, 3
    %s34 = scalar_lea.vmem %s1, %s33
    %35 = vst [vmem:[%s34] sm:%s32] %v31
    %s36 = scalar_lea.vmem [#allocation0], 32
    %v37 = vld [vmem:[%s36] sm:%s14]
    %s38 = sshllo.u32 0, 1
    %s39 = smul.addr 1, 4
    %s40 = scalar_lea.vmem %s1, %s39
    %41 = vst [vmem:[%s40] sm:%s38] %v37
    %s42 = scalar_lea.vmem [#allocation0], 40
    %v43 = vld [vmem:[%s42] sm:%s14]
    %s44 = sshllo.u32 0, 1
    %s45 = smul.addr 1, 5
    %s46 = scalar_lea.vmem %s1, %s45
    %47 = vst [vmem:[%s46] sm:%s44] %v43
    %s48 = scalar_lea.vmem [#allocation0], 48
    %v49 = vld [vmem:[%s48] sm:%s14]
    %s50 = sshllo.u32 0, 1
    %s51 = smul.addr 1, 6
    %s52 = scalar_lea.vmem %s1, %s51
    %53 = vst [vmem:[%s52] sm:%s50] %v49

// kernel: conv_dense_block.2
$region0: #{conv_dense_block.2}
  #allocation0 [shape = 'u32[]', space=smem, size = 0x4, offset = 0x4, fixed_abs, tag = 'smem constant byte address 0x4 - core index']
  #allocation1 [shape = 'u32[144,128]{1,0:T(1,128)}', space=vmem, size = 0x12000, scoped, tag = 'internal scratch']
  %s0 = inlined_call_operand.vmem [shape: bf16[2,16,4], index: 0, kind: input, shape index: {}]
  %s1 = inlined_call_operand.vmem [shape: bf16[3,4,64], index: 1, kind: input, shape index: {}]
  %s2 = inlined_call_operand.vmem [shape: bf16[2,14,64], index: 2, kind: output, shape index: {0}]
  %s3 = inlined_call_operand.vmem [shape: f32[1,1,64], index: 3, kind: output, shape index: {1}]
  %s4 = inlined_call_operand.vmem [shape: f32[1,1,64], index: 4, kind: output, shape index: {2}]
  %5 = xla_tuple %s2, %s3, %s4
  %s6 = sld [smem:[#allocation0]]
  $region34: #{conv_dense_block.2} parent=0
    _
  %s8 = ssub.s32 1, %s6
  %s9 = scalar_select 0, %s8, %s6
  // Predicated region
  $region2: #{conv_dense_block.2} parent=0 // pred_check
    _
  $region3: #{conv_dense_block.2} parent=0 // pred_check_branch
    %11 = sbr.rel (0) target = $region5
  $region4: #{conv_dense_block.2} parent=0 // pred_region
    _
  $region5: #{conv_dense_block.2} parent=0 // pred_fallthru
    _
  // Predicated region
  $region6: #{conv_dense_block.2} parent=0 // pred_check
    _
  $region7: #{conv_dense_block.2} parent=0 // pred_check_branch
    %13 = sbr.rel (0) target = $region9
  $region8: #{conv_dense_block.2} parent=0 // pred_region
    _
  $region9: #{conv_dense_block.2} parent=0 // pred_fallthru
    _
  %v15 = vld [vmem:[%s0] sm:$0xf]
  %v16 = vld [vmem:[%s0 + $0x4] sm:$0xf]
  %v17 = vld [vmem:[%s1] sm:$0x3]
  %s18 = scalar_lea.vmem %s1, 2
  %v19 = vld [vmem:[%s18] sm:$0x3]
  %v22 = vunpack.c.l.b16 %v15
  %v23 = vunpack.c.l.b16 %v16
  %v24 = vpack.c.b16 %v23, %v22
  %v26 = vshrl.u32 %v24, 16
  %v28 = vshll.u32 %v24, 16
  %v30 = vrot.slane %v28, 1
  %v31 = vor.u32 %v26, %v30
  %vm32 = vcmask 31744
  %v34 = vsel %vm32, %v31, 0
  %vm36 = vcmask 1041408
  %v38 = vsel %vm36, %v19, 0
  %40 = vmatprep.subr.bf16.mxu0 0
  %41 = vmatpush1.bf16.msra.mxu0 %v38
  %42 = vmatprep.subr.bf16.mxu0 0
  %43 = vmatpush1.bf16.msra.mxu0 0
  %44 = vmatprep.subr.bf16.mxu0 0
  %45 = vmatpush1.bf16.msra.mxu0 0
  %46 = vmatprep.subr.bf16.mxu0 0
  %47 = vmatpush1.bf16.msra.mxu0 0
  %48 = vmatprep.subr.bf16.mxu0 0
  %49 = vmatpush1.bf16.msra.mxu0 0
  %50 = vmatprep.subr.bf16.mxu0 0
  %51 = vmatpush1.bf16.msra.mxu0 0
  %52 = vmatprep.subr.bf16.mxu0 0
  %53 = vmatpush1.bf16.msra.mxu0 0
  %54 = vmatprep.subr.bf16.mxu0 0
  %55 = vmatpush1.bf16.msra.mxu0 0
  %56 = vmatprep.subr.bf16.mxu0 0
  %57 = vmatpush1.bf16.msra.mxu0 0
  %58 = vmatprep.subr.bf16.mxu0 0
  %59 = vmatpush1.bf16.msra.mxu0 0
  %60 = vmatprep.subr.bf16.mxu0 0
  %61 = vmatpush1.bf16.msra.mxu0 0
  %62 = vmatprep.subr.bf16.mxu0 0
  %63 = vmatpush1.bf16.msra.mxu0 0
  %64 = vmatprep.subr.bf16.mxu0 0
  %65 = vmatpush1.bf16.msra.mxu0 0
  %66 = vmatprep.subr.bf16.mxu0 0
  %67 = vmatpush1.bf16.msra.mxu0 0
  %68 = vmatprep.subr.bf16.mxu0 0
  %69 = vmatpush1.bf16.msra.mxu0 0
  %70 = vmatprep.subr.bf16.mxu0 0
  %71 = vmatpush1.bf16.msra.mxu0 0
  %72 = vmatprep.mubr.bf16.mxu0 0
  %73 = vmatmul.mubr.bf16.gmra.mrb[0].mxu0 %v34
  %v74 = vpop.f32.mrb[0].mxu0
  %v75 = vadd.f32 0.0, %v74
  %v76 = vpop.f32.mrb[0].mxu0
  %v77 = vpop.f32.mrb[0].mxu0
  %v78 = vadd.f32 0.0, %v77
  %v79 = vpop.f32.mrb[0].mxu0
  %80 = vdwg.mxu0
  %v81 = vsel %vm32, %v24, 0
  %v84 = vsel %vm36, %v17, 0
  %86 = vmatprep.subr.bf16.mxu0 0
  %87 = vmatpush1.bf16.msra.mxu0 %v84
  %88 = vmatprep.subr.bf16.mxu0 0
  %89 = vmatpush1.bf16.msra.mxu0 0
  %90 = vmatprep.subr.bf16.mxu0 0
  %91 = vmatpush1.bf16.msra.mxu0 0
  %92 = vmatprep.subr.bf16.mxu0 0
  %93 = vmatpush1.bf16.msra.mxu0 0
  %94 = vmatprep.subr.bf16.mxu0 0
  %95 = vmatpush1.bf16.msra.mxu0 0
  %96 = vmatprep.subr.bf16.mxu0 0
  %97 = vmatpush1.bf16.msra.mxu0 0
  %98 = vmatprep.subr.bf16.mxu0 0
  %99 = vmatpush1.bf16.msra.mxu0 0
  %100 = vmatprep.subr.bf16.mxu0 0
  %101 = vmatpush1.bf16.msra.mxu0 0
  %102 = vmatprep.subr.bf16.mxu0 0
  %103 = vmatpush1.bf16.msra.mxu0 0
  %104 = vmatprep.subr.bf16.mxu0 0
  %105 = vmatpush1.bf16.msra.mxu0 0
  %106 = vmatprep.subr.bf16.mxu0 0
  %107 = vmatpush1.bf16.msra.mxu0 0
  %108 = vmatprep.subr.bf16.mxu0 0
  %109 = vmatpush1.bf16.msra.mxu0 0
  %110 = vmatprep.subr.bf16.mxu0 0
  %111 = vmatpush1.bf16.msra.mxu0 0
  %112 = vmatprep.subr.bf16.mxu0 0
  %113 = vmatpush1.bf16.msra.mxu0 0
  %114 = vmatprep.subr.bf16.mxu0 0
  %115 = vmatpush1.bf16.msra.mxu0 0
  %116 = vmatprep.subr.bf16.mxu0 0
  %117 = vmatpush1.bf16.msra.mxu0 0
  %118 = vmatprep.mubr.bf16.mxu0 0
  %119 = vmatmul.mubr.bf16.gmra.mrb[0].mxu0 %v81
  %v120 = vpop.f32.mrb[0].mxu0
  %v121 = vadd.f32 %v75, %v120
  %v122 = vpop.f32.mrb[0].mxu0
  %v123 = vpop.f32.mrb[0].mxu0
  %v124 = vadd.f32 %v78, %v123
  %v125 = vpop.f32.mrb[0].mxu0
  %126 = vdwg.mxu0
  %s127 = scalar_lea.vmem %s1, 4
  %v128 = vld [vmem:[%s127] sm:$0x3]
  %v129 = vrot.slane %v24, 1
  %v131 = vsel %vm32, %v129, 0
  %v134 = vsel %vm36, %v128, 0
  %136 = vmatprep.subr.bf16.mxu0 0
  %137 = vmatpush1.bf16.msra.mxu0 %v134
  %138 = vmatprep.subr.bf16.mxu0 0
  %139 = vmatpush1.bf16.msra.mxu0 0
  %140 = vmatprep.subr.bf16.mxu0 0
  %141 = vmatpush1.bf16.msra.mxu0 0
  %142 = vmatprep.subr.bf16.mxu0 0
  %143 = vmatpush1.bf16.msra.mxu0 0
  %144 = vmatprep.subr.bf16.mxu0 0
  %145 = vmatpush1.bf16.msra.mxu0 0
  %146 = vmatprep.subr.bf16.mxu0 0
  %147 = vmatpush1.bf16.msra.mxu0 0
  %148 = vmatprep.subr.bf16.mxu0 0
  %149 = vmatpush1.bf16.msra.mxu0 0
  %150 = vmatprep.subr.bf16.mxu0 0
  %151 = vmatpush1.bf16.msra.mxu0 0
  %152 = vmatprep.subr.bf16.mxu0 0
  %153 = vmatpush1.bf16.msra.mxu0 0
  %154 = vmatprep.subr.bf16.mxu0 0
  %155 = vmatpush1.bf16.msra.mxu0 0
  %156 = vmatprep.subr.bf16.mxu0 0
  %157 = vmatpush1.bf16.msra.mxu0 0
  %158 = vmatprep.subr.bf16.mxu0 0
  %159 = vmatpush1.bf16.msra.mxu0 0
  %160 = vmatprep.subr.bf16.mxu0 0
  %161 = vmatpush1.bf16.msra.mxu0 0
  %162 = vmatprep.subr.bf16.mxu0 0
  %163 = vmatpush1.bf16.msra.mxu0 0
  %164 = vmatprep.subr.bf16.mxu0 0
  %165 = vmatpush1.bf16.msra.mxu0 0
  %166 = vmatprep.subr.bf16.mxu0 0
  %167 = vmatpush1.bf16.msra.mxu0 0
  %168 = vmatprep.mubr.bf16.mxu0 0
  %169 = vmatmul.mubr.bf16.gmra.mrb[0].mxu0 %v131
  %v170 = vpop.f32.mrb[0].mxu0
  %v171 = vadd.f32 0.0, %v170
  %v172 = vpop.f32.mrb[0].mxu0
  %v173 = vpop.f32.mrb[0].mxu0
  %v174 = vadd.f32 0.0, %v173
  %v175 = vpop.f32.mrb[0].mxu0
  %176 = vdwg.mxu0
  %v177 = vadd.f32 %v121, %v171
  %v178 = vadd.f32 %v124, %v174
  %v179 = vpack.c.bf16 %v178, %v177
  %v181 = vunpack.c.l.b16 %v179
  %v182 = vunpack.c.h.b16 %v179
  %v183 = vpack.c.b16 %v181, %v181
  %v184 = vpack.c.b16 %v182, %v182
  %vm187 = vcmask 519168
  %188 = vst.msk [vmem:[%s2] sm:$0xf] %vm187, %v183
  %vm189 = vcmask 518144
  %190 = vst.msk [vmem:[%s2 + $0x4] sm:$0x7] %vm189, %v184
  %vm191 = vcmask 523264
  %v192 = vsel %vm191, %v177, 0.0
  %vm193 = vcmask 521216
  %v194 = vsel %vm193, %v178, 0.0
  %v195 = vadd.f32 %v192, %v194
  %v196 = vrot.slane %v195, 4
  %v197 = vadd.f32 %v195, %v196
  %v198 = vrot.slane %v197, 2
  %v199 = vadd.f32 %v197, %v198
  %v200 = vrot.slane %v199, 1
  %v201 = vadd.f32 %v199, %v200
  %v202 = vadd.f32 %v201, 0.0
  %v203 = vmul.f32 %v177, %v177
  %v204 = vmul.f32 %v178, %v178
  %v205 = vsel %vm191, %v203, 0.0
  %v206 = vsel %vm193, %v204, 0.0
  %v207 = vadd.f32 %v205, %v206
  %v208 = vrot.slane %v207, 4
  %v209 = vadd.f32 %v207, %v208
  %v210 = vrot.slane %v209, 2
  %v211 = vadd.f32 %v209, %v210
  %v212 = vrot.slane %v211, 1
  %v213 = vadd.f32 %v211, %v212
  %v214 = vadd.f32 %v213, 0.0
  %s215 = scalar_lea.vmem %s0, 8
  %v216 = vld [vmem:[%s215] sm:$0xf]
  %v217 = vld [vmem:[%s215 + $0x4] sm:$0xf]
  %v218 = vld [vmem:[%s1] sm:$0x3]
  %v219 = vld [vmem:[%s18] sm:$0x3]
  %v222 = vunpack.c.l.b16 %v216
  %v223 = vunpack.c.l.b16 %v217
  %v224 = vpack.c.b16 %v223, %v222
  %v226 = vshrl.u32 %v224, 16
  %v228 = vshll.u32 %v224, 16
  %v230 = vrot.slane %v228, 1
  %v231 = vor.u32 %v226, %v230
  %v233 = vsel %vm32, %v231, 0
  %v236 = vsel %vm36, %v219, 0
  %238 = vmatprep.subr.bf16.mxu0 0
  %239 = vmatpush1.bf16.msra.mxu0 %v236
  %240 = vmatprep.subr.bf16.mxu0 0
  %241 = vmatpush1.bf16.msra.mxu0 0
  %242 = vmatprep.subr.bf16.mxu0 0
  %243 = vmatpush1.bf16.msra.mxu0 0
  %244 = vmatprep.subr.bf16.mxu0 0
  %245 = vmatpush1.bf16.msra.mxu0 0
  %246 = vmatprep.subr.bf16.mxu0 0
  %247 = vmatpush1.bf16.msra.mxu0 0
  %248 = vmatprep.subr.bf16.mxu0 0
  %249 = vmatpush1.bf16.msra.mxu0 0
  %250 = vmatprep.subr.bf16.mxu0 0
  %251 = vmatpush1.bf16.msra.mxu0 0
  %252 = vmatprep.subr.bf16.mxu0 0
  %253 = vmatpush1.bf16.msra.mxu0 0
  %254 = vmatprep.subr.bf16.mxu0 0
  %255 = vmatpush1.bf16.msra.mxu0 0
  %256 = vmatprep.subr.bf16.mxu0 0
  %257 = vmatpush1.bf16.msra.mxu0 0
  %258 = vmatprep.subr.bf16.mxu0 0
  %259 = vmatpush1.bf16.msra.mxu0 0
  %260 = vmatprep.subr.bf16.mxu0 0
  %261 = vmatpush1.bf16.msra.mxu0 0
  %262 = vmatprep.subr.bf16.mxu0 0
  %263 = vmatpush1.bf16.msra.mxu0 0
  %264 = vmatprep.subr.bf16.mxu0 0
  %265 = vmatpush1.bf16.msra.mxu0 0
  %266 = vmatprep.subr.bf16.mxu0 0
  %267 = vmatpush1.bf16.msra.mxu0 0
  %268 = vmatprep.subr.bf16.mxu0 0
  %269 = vmatpush1.bf16.msra.mxu0 0
  %270 = vmatprep.mubr.bf16.mxu0 0
  %271 = vmatmul.mubr.bf16.gmra.mrb[0].mxu0 %v233
  %v272 = vpop.f32.mrb[0].mxu0
  %v273 = vadd.f32 0.0, %v272
  %v274 = vpop.f32.mrb[0].mxu0
  %v275 = vpop.f32.mrb[0].mxu0
  %v276 = vadd.f32 0.0, %v275
  %v277 = vpop.f32.mrb[0].mxu0
  %278 = vdwg.mxu0
  %v279 = vsel %vm32, %v224, 0
  %v282 = vsel %vm36, %v218, 0
  %284 = vmatprep.subr.bf16.mxu0 0
  %285 = vmatpush1.bf16.msra.mxu0 %v282
  %286 = vmatprep.subr.bf16.mxu0 0
  %287 = vmatpush1.bf16.msra.mxu0 0
  %288 = vmatprep.subr.bf16.mxu0 0
  %289 = vmatpush1.bf16.msra.mxu0 0
  %290 = vmatprep.subr.bf16.mxu0 0
  %291 = vmatpush1.bf16.msra.mxu0 0
  %292 = vmatprep.subr.bf16.mxu0 0
  %293 = vmatpush1.bf16.msra.mxu0 0
  %294 = vmatprep.subr.bf16.mxu0 0
  %295 = vmatpush1.bf16.msra.mxu0 0
  %296 = vmatprep.subr.bf16.mxu0 0
  %297 = vmatpush1.bf16.msra.mxu0 0
  %298 = vmatprep.subr.bf16.mxu0 0
  %299 = vmatpush1.bf16.msra.mxu0 0
  %300 = vmatprep.subr.bf16.mxu0 0
  %301 = vmatpush1.bf16.msra.mxu0 0
  %302 = vmatprep.subr.bf16.mxu0 0
  %303 = vmatpush1.bf16.msra.mxu0 0
  %304 = vmatprep.subr.bf16.mxu0 0
  %305 = vmatpush1.bf16.msra.mxu0 0
  %306 = vmatprep.subr.bf16.mxu0 0
  %307 = vmatpush1.bf16.msra.mxu0 0
  %308 = vmatprep.subr.bf16.mxu0 0
  %309 = vmatpush1.bf16.msra.mxu0 0
  %310 = vmatprep.subr.bf16.mxu0 0
  %311 = vmatpush1.bf16.msra.mxu0 0
  %312 = vmatprep.subr.bf16.mxu0 0
  %313 = vmatpush1.bf16.msra.mxu0 0
  %314 = vmatprep.subr.bf16.mxu0 0
  %315 = vmatpush1.bf16.msra.mxu0 0
  %316 = vmatprep.mubr.bf16.mxu0 0
  %317 = vmatmul.mubr.bf16.gmra.mrb[0].mxu0 %v279
  %v318 = vpop.f32.mrb[0].mxu0
  %v319 = vadd.f32 %v273, %v318
  %v320 = vpop.f32.mrb[0].mxu0
  %v321 = vpop.f32.mrb[0].mxu0
  %v322 = vadd.f32 %v276, %v321
  %v323 = vpop.f32.mrb[0].mxu0
  %324 = vdwg.mxu0
  %v325 = vld [vmem:[%s127] sm:$0x3]
  %v326 = vrot.slane %v224, 1
  %v328 = vsel %vm32, %v326, 0
  %v331 = vsel %vm36, %v325, 0
  %333 = vmatprep.subr.bf16.mxu0 0
  %334 = vmatpush1.bf16.msra.mxu0 %v331
  %335 = vmatprep.subr.bf16.mxu0 0
  %336 = vmatpush1.bf16.msra.mxu0 0
  %337 = vmatprep.subr.bf16.mxu0 0
  %338 = vmatpush1.bf16.msra.mxu0 0
  %339 = vmatprep.subr.bf16.mxu0 0
  %340 = vmatpush1.bf16.msra.mxu0 0
  %341 = vmatprep.subr.bf16.mxu0 0
  %342 = vmatpush1.bf16.msra.mxu0 0
  %343 = vmatprep.subr.bf16.mxu0 0
  %344 = vmatpush1.bf16.msra.mxu0 0
  %345 = vmatprep.subr.bf16.mxu0 0
  %346 = vmatpush1.bf16.msra.mxu0 0
  %347 = vmatprep.subr.bf16.mxu0 0
  %348 = vmatpush1.bf16.msra.mxu0 0
  %349 = vmatprep.subr.bf16.mxu0 0
  %350 = vmatpush1.bf16.msra.mxu0 0
  %351 = vmatprep.subr.bf16.mxu0 0
  %352 = vmatpush1.bf16.msra.mxu0 0
  %353 = vmatprep.subr.bf16.mxu0 0
  %354 = vmatpush1.bf16.msra.mxu0 0
  %355 = vmatprep.subr.bf16.mxu0 0
  %356 = vmatpush1.bf16.msra.mxu0 0
  %357 = vmatprep.subr.bf16.mxu0 0
  %358 = vmatpush1.bf16.msra.mxu0 0
  %359 = vmatprep.subr.bf16.mxu0 0
  %360 = vmatpush1.bf16.msra.mxu0 0
  %361 = vmatprep.subr.bf16.mxu0 0
  %362 = vmatpush1.bf16.msra.mxu0 0
  %363 = vmatprep.subr.bf16.mxu0 0
  %364 = vmatpush1.bf16.msra.mxu0 0
  %365 = vmatprep.mubr.bf16.mxu0 0
  %366 = vmatmul.mubr.bf16.gmra.mrb[0].mxu0 %v328
  %v367 = vpop.f32.mrb[0].mxu0
  %v368 = vadd.f32 0.0, %v367
  %v369 = vpop.f32.mrb[0].mxu0
  %v370 = vpop.f32.mrb[0].mxu0
  %v371 = vadd.f32 0.0, %v370
  %v372 = vpop.f32.mrb[0].mxu0
  %373 = vdwg.mxu0
  %v374 = vadd.f32 %v319, %v368
  %v375 = vadd.f32 %v322, %v371
  %v376 = vpack.c.bf16 %v375, %v374
  %v378 = vunpack.c.l.b16 %v376
  %v379 = vunpack.c.h.b16 %v376
  %v380 = vpack.c.b16 %v378, %v378
  %v381 = vpack.c.b16 %v379, %v379
  %s384 = scalar_lea.vmem %s2, 8
  %385 = vst.msk [vmem:[%s384] sm:$0xf] %vm187, %v380
  %386 = vst.msk [vmem:[%s384 + $0x4] sm:$0x7] %vm189, %v381
  %v387 = vsel %vm191, %v374, 0.0
  %v388 = vsel %vm193, %v375, 0.0
  %v389 = vadd.f32 %v387, %v388
  %v390 = vrot.slane %v389, 4
  %v391 = vadd.f32 %v389, %v390
  %v392 = vrot.slane %v391, 2
  %v393 = vadd.f32 %v391, %v392
  %v394 = vrot.slane %v393, 1
  %v395 = vadd.f32 %v393, %v394
  %v396 = vadd.f32 %v202, %v395
  %v397 = vmul.f32 %v374, %v374
  %v398 = vmul.f32 %v375, %v375
  %v399 = vsel %vm191, %v397, 0.0
  %v400 = vsel %vm193, %v398, 0.0
  %v401 = vadd.f32 %v399, %v400
  %v402 = vrot.slane %v401, 4
  %v403 = vadd.f32 %v401, %v402
  %v404 = vrot.slane %v403, 2
  %v405 = vadd.f32 %v403, %v404
  %v406 = vrot.slane %v405, 1
  %v407 = vadd.f32 %v405, %v406
  %v408 = vadd.f32 %v214, %v407
  %vm409 = vcmask 516096
  %410 = vst.msk [vmem:[%s3] sm:$0x1] %vm409, %v396
  %411 = vst.msk [vmem:[%s4] sm:$0x1] %vm409, %v408
  // Predicated region
  $region10: #{conv_dense_block.2} parent=0 // pred_check
    _
  $region11: #{conv_dense_block.2} parent=0 // pred_check_branch
    %413 = sbr.rel (0) target = $region13
  $region12: #{conv_dense_block.2} parent=0 // pred_region
    _
  $region13: #{conv_dense_block.2} parent=0 // pred_fallthru
    _
  // Predicated region
  $region14: #{conv_dense_block.2} parent=0 // pred_check
    _
  $region15: #{conv_dense_block.2} parent=0 // pred_check_branch
    %415 = sbr.rel (0) target = $region17
  $region16: #{conv_dense_block.2} parent=0 // pred_region
    _
  $region17: #{conv_dense_block.2} parent=0 // pred_fallthru
    _
  // Predicated region
  $region18: #{conv_dense_block.2} parent=0 // pred_check
    _
  $region19: #{conv_dense_block.2} parent=0 // pred_check_branch
    %417 = sbr.rel (0) target = $region21
  $region20: #{conv_dense_block.2} parent=0 // pred_region
    _
  $region21: #{conv_dense_block.2} parent=0 // pred_fallthru
    _
  // Predicated region
  $region22: #{conv_dense_block.2} parent=0 // pred_check
    _
  $region23: #{conv_dense_block.2} parent=0 // pred_check_branch
    %419 = sbr.rel (0) target = $region25
  $region24: #{conv_dense_block.2} parent=0 // pred_region
    _
  $region25: #{conv_dense_block.2} parent=0 // pred_fallthru
    _
  // Predicated region
  $region26: #{conv_dense_block.2} parent=0 // pred_check
    _
  $region27: #{conv_dense_block.2} parent=0 // pred_check_branch
    %421 = sbr.rel (0) target = $region29
  $region28: #{conv_dense_block.2} parent=0 // pred_region
    _
  $region29: #{conv_dense_block.2} parent=0 // pred_fallthru
    _
  // Predicated region
  $region30: #{conv_dense_block.2} parent=0 // pred_check
    _
  $region31: #{conv_dense_block.2} parent=0 // pred_check_branch
    %423 = sbr.rel (0) target = $region33
  $region32: #{conv_dense_block.2} parent=0 // pred_region
    _
  $region33: #{conv_dense_block.2} parent=0 // pred_fallthru
    _

// kernel: conv_dense_block.3
$region0: #{conv_dense_block.3}
  #allocation0 [shape = 'u32[]', space=smem, size = 0x4, offset = 0x4, fixed_abs, tag = 'smem constant byte address 0x4 - core index']
  #allocation1 [shape = 'u32[144,128]{1,0:T(1,128)}', space=vmem, size = 0x12000, scoped, tag = 'internal scratch']
  %s0 = inlined_call_operand.vmem [shape: bf16[2,896], index: 0, kind: input, shape index: {}]
  %s1 = inlined_call_operand.vmem [shape: f32[1,896], index: 1, kind: input, shape index: {}]
  %s2 = inlined_call_operand.vmem [shape: f32[1,896], index: 2, kind: input, shape index: {}]
  %s3 = inlined_call_operand.vmem [shape: bf16[896,32], index: 3, kind: input, shape index: {}]
  %s4 = inlined_call_operand.vmem [shape: f32[1,32], index: 4, kind: input, shape index: {}]
  %s5 = inlined_call_operand.hbm [shape: f32[2,32], index: 5, kind: output, shape index: {}]
  %s6 = sld [smem:[#allocation0]]
  $region34: #{conv_dense_block.3} parent=0
    _
  %s8 = ssub.s32 1, %s6
  %s9 = scalar_select 0, %s8, %s6
  $region1: #{conv_dense_block.3} parent=0
    #allocation2 [shape = 'u8[1024]{0}', space=vmem, size = 0x400, scoped, tag = 'output window, operand 0, single buffered']
    #allocation3 [shape = 's32[1]{0}', space=sflag, size = 0x4, scoped, tag = 'scoped memory for conv_dense_block.3']
    %10 = vsyncpa [#allocation3], 0
    // Predicated region
    $region2: #{conv_dense_block.3} parent=1 // pred_check
      _
    $region3: #{conv_dense_block.3} parent=1 // pred_check_branch
      %12 = sbr.rel (0) target = $region5
    $region4: #{conv_dense_block.3} parent=1 // pred_region
      _
    $region5: #{conv_dense_block.3} parent=1 // pred_fallthru
      _
    // Predicated region
    $region6: #{conv_dense_block.3} parent=1 // pred_check
      _
    $region7: #{conv_dense_block.3} parent=1 // pred_check_branch
      %14 = sbr.rel (0) target = $region9
    $region8: #{conv_dense_block.3} parent=1 // pred_region
      _
    $region9: #{conv_dense_block.3} parent=1 // pred_fallthru
      _
    // Predicated region
    $region10: #{conv_dense_block.3} parent=1 // pred_check
      _
    $region11: #{conv_dense_block.3} parent=1 // pred_check_branch
      %16 = sbr.rel (0) target = $region13
    $region12: #{conv_dense_block.3} parent=1 // pred_region
      _
    $region13: #{conv_dense_block.3} parent=1 // pred_fallthru
      _
    // Predicated region
    $region14: #{conv_dense_block.3} parent=1 // pred_check
      _
    $region15: #{conv_dense_block.3} parent=1 // pred_check_branch
      %18 = sbr.rel (0) target = $region17
    $region16: #{conv_dense_block.3} parent=1 // pred_region
      _
    $region17: #{conv_dense_block.3} parent=1 // pred_fallthru
      _
    // Predicated region
    $region18: #{conv_dense_block.3} parent=1 // pred_check
      _
    $region19: #{conv_dense_block.3} parent=1 // pred_check_branch
      %20 = sbr.rel (0) target = $region21
    $region20: #{conv_dense_block.3} parent=1 // pred_region
      _
    $region21: #{conv_dense_block.3} parent=1 // pred_fallthru
      _
    %p22 = scmp.eq.s32.totalorder 0, 0
    // Predicated region
    $region22: #{conv_dense_block.3} parent=1 // pred_check
      %p23 = pneg %p22
    $region23: #{conv_dense_block.3} parent=1 // pred_check_branch
      %25 = sbr.rel (%p23) target = $region25
    $region24: #{conv_dense_block.3} parent=1 // pred_region
      %v26 = vld [vmem:[%s4] sm:$0x1]
      %v28 = vlaneseq
      %v29 = vshrl.u32 %v28, 7
      %v30 = vsub.s32 0, %v29
      %v31 = vrot.slane %v26, %v30
      %vm33 = vcmask 254976
      %34 = vst.msk [vmem:[#allocation2] sm:$0x3] %vm33, %v31
    $region25: #{conv_dense_block.3} parent=1 // pred_fallthru
      _
    %v35 = vld [vmem:[%s0] sm:$0x7f]
    %v36 = vunpack.c.l.bf16 %v35
    %v37 = vunpack.c.h.bf16 %v35
    %v38 = vld [vmem:[%s1] sm:$0xff]
    %v40 = vlaneseq
    %v41 = vshrl.u32 %v40, 7
    %v42 = vsub.s32 0, %v41
    %v43 = vrot.slane %v38, %v42
    %v44 = vlaneseq
    %v45 = vshrl.u32 %v44, 7
    %v46 = vsub.s32 1, %v45
    %v47 = vrot.slane %v38, %v46
    %v48 = vlaneseq
    %v49 = vshrl.u32 %v48, 7
    %v50 = vsub.s32 2, %v49
    %v51 = vrot.slane %v38, %v50
    %v52 = vlaneseq
    %v53 = vshrl.u32 %v52, 7
    %v54 = vsub.s32 3, %v53
    %v55 = vrot.slane %v38, %v54
    %v56 = vlaneseq
    %v57 = vshrl.u32 %v56, 7
    %v58 = vsub.s32 4, %v57
    %v59 = vrot.slane %v38, %v58
    %v60 = vlaneseq
    %v61 = vshrl.u32 %v60, 7
    %v62 = vsub.s32 5, %v61
    %v63 = vrot.slane %v38, %v62
    %v64 = vlaneseq
    %v65 = vshrl.u32 %v64, 7
    %v66 = vsub.s32 6, %v65
    %v67 = vrot.slane %v38, %v66
    %v68 = vcombine.low %v43, %v47
    %v69 = vcombine.low %v51, %v55
    %v71 = vunpack.c.l.s4 1983009808
    %v72 = vunpack.c.0.s8 %v71
    %v73 = vlaneseq
    %v74 = vshrl.u32 %v73, 7
    %v75 = vsub.s32 %v72, %v74
    %v76 = vrot.slane %v68, %v75
    %v78 = vunpack.c.l.s4 1983009808
    %v79 = vunpack.c.0.s8 %v78
    %v80 = vlaneseq
    %v81 = vshrl.u32 %v80, 7
    %v82 = vsub.s32 %v79, %v81
    %v83 = vrot.slane %v69, %v82
    %v84 = vcombine.low %v76, %v83
    %v85 = vcombine.low %v59, %v63
    %v87 = vunpack.c.l.s4 1983009808
    %v88 = vunpack.c.0.s8 %v87
    %v89 = vlaneseq
    %v90 = vshrl.u32 %v89, 7
    %v91 = vsub.s32 %v88, %v90
    %v92 = vrot.slane %v85, %v91
    %v94 = vunpack.c.l.s4 1983009808
    %v95 = vunpack.c.0.s8 %v94
    %v96 = vlaneseq
    %v97 = vshrl.u32 %v96, 7
    %v98 = vsub.s32 %v95, %v97
    %v99 = vrot.slane %v67, %v98
    %v100 = vcombine.low %v92, %v99
    %v103 = vmul.f32 %v36, %v84
    %v104 = vmul.f32 %v37, %v100
    %v105 = vld [vmem:[%s2] sm:$0xff]
    %v107 = vlaneseq
    %v108 = vshrl.u32 %v107, 7
    %v109 = vsub.s32 0, %v108
    %v110 = vrot.slane %v105, %v109
    %v111 = vlaneseq
    %v112 = vshrl.u32 %v111, 7
    %v113 = vsub.s32 1, %v112
    %v114 = vrot.slane %v105, %v113
    %v115 = vlaneseq
    %v116 = vshrl.u32 %v115, 7
    %v117 = vsub.s32 2, %v116
    %v118 = vrot.slane %v105, %v117
    %v119 = vlaneseq
    %v120 = vshrl.u32 %v119, 7
    %v121 = vsub.s32 3, %v120
    %v122 = vrot.slane %v105, %v121
    %v123 = vlaneseq
    %v124 = vshrl.u32 %v123, 7
    %v125 = vsub.s32 4, %v124
    %v126 = vrot.slane %v105, %v125
    %v127 = vlaneseq
    %v128 = vshrl.u32 %v127, 7
    %v129 = vsub.s32 5, %v128
    %v130 = vrot.slane %v105, %v129
    %v131 = vlaneseq
    %v132 = vshrl.u32 %v131, 7
    %v133 = vsub.s32 6, %v132
    %v134 = vrot.slane %v105, %v133
    %v135 = vcombine.low %v110, %v114
    %v136 = vcombine.low %v118, %v122
    %v138 = vunpack.c.l.s4 1983009808
    %v139 = vunpack.c.0.s8 %v138
    %v140 = vlaneseq
    %v141 = vshrl.u32 %v140, 7
    %v142 = vsub.s32 %v139, %v141
    %v143 = vrot.slane %v135, %v142
    %v145 = vunpack.c.l.s4 1983009808
    %v146 = vunpack.c.0.s8 %v145
    %v147 = vlaneseq
    %v148 = vshrl.u32 %v147, 7
    %v149 = vsub.s32 %v146, %v148
    %v150 = vrot.slane %v136, %v149
    %v151 = vcombine.low %v143, %v150
    %v152 = vcombine.low %v126, %v130
    %v154 = vunpack.c.l.s4 1983009808
    %v155 = vunpack.c.0.s8 %v154
    %v156 = vlaneseq
    %v157 = vshrl.u32 %v156, 7
    %v158 = vsub.s32 %v155, %v157
    %v159 = vrot.slane %v152, %v158
    %v161 = vunpack.c.l.s4 1983009808
    %v162 = vunpack.c.0.s8 %v161
    %v163 = vlaneseq
    %v164 = vshrl.u32 %v163, 7
    %v165 = vsub.s32 %v162, %v164
    %v166 = vrot.slane %v134, %v165
    %v167 = vcombine.low %v159, %v166
    %v170 = vadd.f32 %v103, %v151
    %v171 = vadd.f32 %v104, %v167
    %v172 = vmax.f32 %v170, 0.0
    %v173 = vmax.f32 %v171, 0.0
    %v174 = vld [vmem:[#allocation2] sm:$0x3]
    %v177 = vcombine.high %v172, %v172
    %v179 = vunpack.c.l.s4 1983009808
    %v180 = vunpack.c.0.s8 %v179
    %v181 = vlaneseq
    %v182 = vshrl.u32 %v181, 7
    %v183 = vsub.s32 %v180, %v182
    %v184 = vrot.slane %v172, %v183
    %v186 = vunpack.c.l.s4 1983009808
    %v187 = vunpack.c.0.s8 %v186
    %v188 = vlaneseq
    %v189 = vshrl.u32 %v188, 7
    %v190 = vsub.s32 %v187, %v189
    %v191 = vrot.slane %v177, %v190
    %v192 = vcombine.high %v184, %v184
    %v193 = vcombine.high %v191, %v191
    %v194 = vcombine.high %v173, %v173
    %v196 = vunpack.c.l.s4 1983009808
    %v197 = vunpack.c.0.s8 %v196
    %v198 = vlaneseq
    %v199 = vshrl.u32 %v198, 7
    %v200 = vsub.s32 %v197, %v199
    %v201 = vrot.slane %v173, %v200
    %v203 = vunpack.c.l.s4 1983009808
    %v204 = vunpack.c.0.s8 %v203
    %v205 = vlaneseq
    %v206 = vshrl.u32 %v205, 7
    %v207 = vsub.s32 %v204, %v206
    %v208 = vrot.slane %v194, %v207
    %v209 = vcombine.high %v201, %v201
    %v217 = vpack.c.bf16 %v184, %v184
    %v218 = vpack.c.bf16 %v192, %v192
    %v219 = vpack.c.bf16 %v191, %v191
    %v220 = vpack.c.bf16 %v193, %v193
    %v221 = vpack.c.bf16 %v201, %v201
    %v222 = vpack.c.bf16 %v209, %v209
    %v223 = vpack.c.bf16 %v208, %v208
    %v224 = vld [vmem:[%s3] sm:$0xf]
    %v225 = vld [vmem:[%s3 + $0x4] sm:$0xf]
    %v226 = vld [vmem:[%s3 + $0x8] sm:$0xf]
    %v227 = vld [vmem:[%s3 + $0xc] sm:$0xf]
    %v228 = vld [vmem:[%s3 + $0x10] sm:$0xf]
    %v229 = vld [vmem:[%s3 + $0x14] sm:$0xf]
    %v230 = vld [vmem:[%s3 + $0x18] sm:$0xf]
    %v231 = vld [vmem:[%s3 + $0x1c] sm:$0xf]
    %v232 = vld [vmem:[%s3 + $0x20] sm:$0xf]
    %v233 = vld [vmem:[%s3 + $0x24] sm:$0xf]
    %v234 = vld [vmem:[%s3 + $0x28] sm:$0xf]
    %v235 = vld [vmem:[%s3 + $0x2c] sm:$0xf]
    %v236 = vld [vmem:[%s3 + $0x30] sm:$0xf]
    %v237 = vld [vmem:[%s3 + $0x34] sm:$0xf]
    %v238 = vld [vmem:[%s3 + $0x38] sm:$0xf]
    %v239 = vld [vmem:[%s3 + $0x3c] sm:$0xf]
    %v240 = vld [vmem:[%s3 + $0x40] sm:$0xf]
    %v241 = vld [vmem:[%s3 + $0x44] sm:$0xf]
    %v242 = vld [vmem:[%s3 + $0x48] sm:$0xf]
    %v243 = vld [vmem:[%s3 + $0x4c] sm:$0xf]
    %v244 = vld [vmem:[%s3 + $0x50] sm:$0xf]
    %v245 = vld [vmem:[%s3 + $0x54] sm:$0xf]
    %v246 = vld [vmem:[%s3 + $0x58] sm:$0xf]
    %v247 = vld [vmem:[%s3 + $0x5c] sm:$0xf]
    %v248 = vld [vmem:[%s3 + $0x60] sm:$0xf]
    %v249 = vld [vmem:[%s3 + $0x64] sm:$0xf]
    %v250 = vld [vmem:[%s3 + $0x68] sm:$0xf]
    %v251 = vld [vmem:[%s3 + $0x6c] sm:$0xf]
    %v252 = vld [vmem:[%s3 + $0x70] sm:$0xf]
    %v253 = vld [vmem:[%s3 + $0x74] sm:$0xf]
    %v254 = vld [vmem:[%s3 + $0x78] sm:$0xf]
    %v255 = vld [vmem:[%s3 + $0x7c] sm:$0xf]
    %v256 = vld [vmem:[%s3 + $0x80] sm:$0xf]
    %v257 = vld [vmem:[%s3 + $0x84] sm:$0xf]
    %v258 = vld [vmem:[%s3 + $0x88] sm:$0xf]
    %v259 = vld [vmem:[%s3 + $0x8c] sm:$0xf]
    %v260 = vld [vmem:[%s3 + $0x90] sm:$0xf]
    %v261 = vld [vmem:[%s3 + $0x94] sm:$0xf]
    %v262 = vld [vmem:[%s3 + $0x98] sm:$0xf]
    %v263 = vld [vmem:[%s3 + $0x9c] sm:$0xf]
    %v264 = vld [vmem:[%s3 + $0xa0] sm:$0xf]
    %v265 = vld [vmem:[%s3 + $0xa4] sm:$0xf]
    %v266 = vld [vmem:[%s3 + $0xa8] sm:$0xf]
    %v267 = vld [vmem:[%s3 + $0xac] sm:$0xf]
    %v268 = vld [vmem:[%s3 + $0xb0] sm:$0xf]
    %v269 = vld [vmem:[%s3 + $0xb4] sm:$0xf]
    %v270 = vld [vmem:[%s3 + $0xb8] sm:$0xf]
    %v271 = vld [vmem:[%s3 + $0xbc] sm:$0xf]
    %v272 = vld [vmem:[%s3 + $0xc0] sm:$0xf]
    %v273 = vld [vmem:[%s3 + $0xc4] sm:$0xf]
    %v274 = vld [vmem:[%s3 + $0xc8] sm:$0xf]
    %v275 = vld [vmem:[%s3 + $0xcc] sm:$0xf]
    %v276 = vld [vmem:[%s3 + $0xd0] sm:$0xf]
    %v277 = vld [vmem:[%s3 + $0xd4] sm:$0xf]
    %v278 = vld [vmem:[%s3 + $0xd8] sm:$0xf]
    %v279 = vld [vmem:[%s3 + $0xdc] sm:$0xf]
    %v280 = vld [vmem:[%s3 + $0xe0] sm:$0xf]
    %v281 = vld [vmem:[%s3 + $0xe4] sm:$0xf]
    %v282 = vld [vmem:[%s3 + $0xe8] sm:$0xf]
    %v283 = vld [vmem:[%s3 + $0xec] sm:$0xf]
    %v284 = vld [vmem:[%s3 + $0xf0] sm:$0xf]
    %v285 = vld [vmem:[%s3 + $0xf4] sm:$0xf]
    %v286 = vld [vmem:[%s3 + $0xf8] sm:$0xf]
    %v287 = vld [vmem:[%s3 + $0xfc] sm:$0xf]
    %v288 = vld [vmem:[%s3 + $0x100] sm:$0xf]
    %v289 = vld [vmem:[%s3 + $0x104] sm:$0xf]
    %v290 = vld [vmem:[%s3 + $0x108] sm:$0xf]
    %v291 = vld [vmem:[%s3 + $0x10c] sm:$0xf]
    %v292 = vld [vmem:[%s3 + $0x110] sm:$0xf]
    %v293 = vld [vmem:[%s3 + $0x114] sm:$0xf]
    %v294 = vld [vmem:[%s3 + $0x118] sm:$0xf]
    %v295 = vld [vmem:[%s3 + $0x11c] sm:$0xf]
    %v296 = vld [vmem:[%s3 + $0x120] sm:$0xf]
    %v297 = vld [vmem:[%s3 + $0x124] sm:$0xf]
    %v298 = vld [vmem:[%s3 + $0x128] sm:$0xf]
    %v299 = vld [vmem:[%s3 + $0x12c] sm:$0xf]
    %v300 = vld [vmem:[%s3 + $0x130] sm:$0xf]
    %v301 = vld [vmem:[%s3 + $0x134] sm:$0xf]
    %v302 = vld [vmem:[%s3 + $0x138] sm:$0xf]
    %v303 = vld [vmem:[%s3 + $0x13c] sm:$0xf]
    %v304 = vld [vmem:[%s3 + $0x140] sm:$0xf]
    %v305 = vld [vmem:[%s3 + $0x144] sm:$0xf]
    %v306 = vld [vmem:[%s3 + $0x148] sm:$0xf]
    %v307 = vld [vmem:[%s3 + $0x14c] sm:$0xf]
    %v308 = vld [vmem:[%s3 + $0x150] sm:$0xf]
    %v309 = vld [vmem:[%s3 + $0x154] sm:$0xf]
    %v310 = vld [vmem:[%s3 + $0x158] sm:$0xf]
    %v311 = vld [vmem:[%s3 + $0x15c] sm:$0xf]
    %v312 = vld [vmem:[%s3 + $0x160] sm:$0xf]
    %v313 = vld [vmem:[%s3 + $0x164] sm:$0xf]
    %v314 = vld [vmem:[%s3 + $0x168] sm:$0xf]
    %v315 = vld [vmem:[%s3 + $0x16c] sm:$0xf]
    %v316 = vld [vmem:[%s3 + $0x170] sm:$0xf]
    %v317 = vld [vmem:[%s3 + $0x174] sm:$0xf]
    %v318 = vld [vmem:[%s3 + $0x178] sm:$0xf]
    %v319 = vld [vmem:[%s3 + $0x17c] sm:$0xf]
    %v320 = vld [vmem:[%s3 + $0x180] sm:$0xf]
    %v321 = vld [vmem:[%s3 + $0x184] sm:$0xf]
    %v322 = vld [vmem:[%s3 + $0x188] sm:$0xf]
    %v323 = vld [vmem:[%s3 + $0x18c] sm:$0xf]
    %v324 = vld [vmem:[%s3 + $0x190] sm:$0xf]
    %v325 = vld [vmem:[%s3 + $0x194] sm:$0xf]
    %v326 = vld [vmem:[%s3 + $0x198] sm:$0xf]
    %v327 = vld [vmem:[%s3 + $0x19c] sm:$0xf]
    %v328 = vld [vmem:[%s3 + $0x1a0] sm:$0xf]
    %v329 = vld [vmem:[%s3 + $0x1a4] sm:$0xf]
    %v330 = vld [vmem:[%s3 + $0x1a8] sm:$0xf]
    %v331 = vld [vmem:[%s3 + $0x1ac] sm:$0xf]
    %v332 = vld [vmem:[%s3 + $0x1b0] sm:$0xf]
    %v333 = vld [vmem:[%s3 + $0x1b4] sm:$0xf]
    %v334 = vld [vmem:[%s3 + $0x1b8] sm:$0xf]
    %v335 = vld [vmem:[%s3 + $0x1bc] sm:$0xf]
    %v448 = vunpack.c.l.b16 %v224
    %v449 = vunpack.c.l.b16 %v225
    %v450 = vunpack.c.l.b16 %v226
    %v451 = vunpack.c.l.b16 %v227
    %v452 = vunpack.c.l.b16 %v228
    %v453 = vunpack.c.l.b16 %v229
    %v454 = vunpack.c.l.b16 %v230
    %v455 = vunpack.c.l.b16 %v231
    %v456 = vunpack.c.l.b16 %v232
    %v457 = vunpack.c.l.b16 %v233
    %v458 = vunpack.c.l.b16 %v234
    %v459 = vunpack.c.l.b16 %v235
    %v460 = vunpack.c.l.b16 %v236
    %v461 = vunpack.c.l.b16 %v237
    %v462 = vunpack.c.l.b16 %v238
    %v463 = vunpack.c.l.b16 %v239
    %v464 = vunpack.c.l.b16 %v240
    %v465 = vunpack.c.l.b16 %v241
    %v466 = vunpack.c.l.b16 %v242
    %v467 = vunpack.c.l.b16 %v243
    %v468 = vunpack.c.l.b16 %v244
    %v469 = vunpack.c.l.b16 %v245
    %v470 = vunpack.c.l.b16 %v246
    %v471 = vunpack.c.l.b16 %v247
    %v472 = vunpack.c.l.b16 %v248
    %v473 = vunpack.c.l.b16 %v249
    %v474 = vunpack.c.l.b16 %v250
    %v475 = vunpack.c.l.b16 %v251
    %v476 = vunpack.c.l.b16 %v252
    %v477 = vunpack.c.l.b16 %v253
    %v478 = vunpack.c.l.b16 %v254
    %v479 = vunpack.c.l.b16 %v255
    %v480 = vunpack.c.l.b16 %v256
    %v481 = vunpack.c.l.b16 %v257
    %v482 = vunpack.c.l.b16 %v258
    %v483 = vunpack.c.l.b16 %v259
    %v484 = vunpack.c.l.b16 %v260
    %v485 = vunpack.c.l.b16 %v261
    %v486 = vunpack.c.l.b16 %v262
    %v487 = vunpack.c.l.b16 %v263
    %v488 = vunpack.c.l.b16 %v264
    %v489 = vunpack.c.l.b16 %v265
    %v490 = vunpack.c.l.b16 %v266
    %v491 = vunpack.c.l.b16 %v267
    %v492 = vunpack.c.l.b16 %v268
    %v493 = vunpack.c.l.b16 %v269
    %v494 = vunpack.c.l.b16 %v270
    %v495 = vunpack.c.l.b16 %v271
    %v496 = vunpack.c.l.b16 %v272
    %v497 = vunpack.c.l.b16 %v273
    %v498 = vunpack.c.l.b16 %v274
    %v499 = vunpack.c.l.b16 %v275
    %v500 = vunpack.c.l.b16 %v276
    %v501 = vunpack.c.l.b16 %v277
    %v502 = vunpack.c.l.b16 %v278
    %v503 = vunpack.c.l.b16 %v279
    %v504 = vunpack.c.l.b16 %v280
    %v505 = vunpack.c.l.b16 %v281
    %v506 = vunpack.c.l.b16 %v282
    %v507 = vunpack.c.l.b16 %v283
    %v508 = vunpack.c.l.b16 %v284
    %v509 = vunpack.c.l.b16 %v285
    %v510 = vunpack.c.l.b16 %v286
    %v511 = vunpack.c.l.b16 %v287
    %v512 = vunpack.c.l.b16 %v288
    %v513 = vunpack.c.l.b16 %v289
    %v514 = vunpack.c.l.b16 %v290
    %v515 = vunpack.c.l.b16 %v291
    %v516 = vunpack.c.l.b16 %v292
    %v517 = vunpack.c.l.b16 %v293
    %v518 = vunpack.c.l.b16 %v294
    %v519 = vunpack.c.l.b16 %v295
    %v520 = vunpack.c.l.b16 %v296
    %v521 = vunpack.c.l.b16 %v297
    %v522 = vunpack.c.l.b16 %v298
    %v523 = vunpack.c.l.b16 %v299
    %v524 = vunpack.c.l.b16 %v300
    %v525 = vunpack.c.l.b16 %v301
    %v526 = vunpack.c.l.b16 %v302
    %v527 = vunpack.c.l.b16 %v303
    %v528 = vunpack.c.l.b16 %v304
    %v529 = vunpack.c.l.b16 %v305
    %v530 = vunpack.c.l.b16 %v306
    %v531 = vunpack.c.l.b16 %v307
    %v532 = vunpack.c.l.b16 %v308
    %v533 = vunpack.c.l.b16 %v309
    %v534 = vunpack.c.l.b16 %v310
    %v535 = vunpack.c.l.b16 %v311
    %v536 = vunpack.c.l.b16 %v312
    %v537 = vunpack.c.l.b16 %v313
    %v538 = vunpack.c.l.b16 %v314
    %v539 = vunpack.c.l.b16 %v315
    %v540 = vunpack.c.l.b16 %v316
    %v541 = vunpack.c.l.b16 %v317
    %v542 = vunpack.c.l.b16 %v318
    %v543 = vunpack.c.l.b16 %v319
    %v544 = vunpack.c.l.b16 %v320
    %v545 = vunpack.c.l.b16 %v321
    %v546 = vunpack.c.l.b16 %v322
    %v547 = vunpack.c.l.b16 %v323
    %v548 = vunpack.c.l.b16 %v324
    %v549 = vunpack.c.l.b16 %v325
    %v550 = vunpack.c.l.b16 %v326
    %v551 = vunpack.c.l.b16 %v327
    %v552 = vunpack.c.l.b16 %v328
    %v553 = vunpack.c.l.b16 %v329
    %v554 = vunpack.c.l.b16 %v330
    %v555 = vunpack.c.l.b16 %v331
    %v556 = vunpack.c.l.b16 %v332
    %v557 = vunpack.c.l.b16 %v333
    %v558 = vunpack.c.l.b16 %v334
    %v559 = vunpack.c.l.b16 %v335
    %v560 = vpack.c.b16 %v449, %v448
    %v561 = vpack.c.b16 %v451, %v450
    %v562 = vpack.c.b16 %v453, %v452
    %v563 = vpack.c.b16 %v455, %v454
    %v564 = vpack.c.b16 %v457, %v456
    %v565 = vpack.c.b16 %v459, %v458
    %v566 = vpack.c.b16 %v461, %v460
    %v567 = vpack.c.b16 %v463, %v462
    %v568 = vpack.c.b16 %v465, %v464
    %v569 = vpack.c.b16 %v467, %v466
    %v570 = vpack.c.b16 %v469, %v468
    %v571 = vpack.c.b16 %v471, %v470
    %v572 = vpack.c.b16 %v473, %v472
    %v573 = vpack.c.b16 %v475, %v474
    %v574 = vpack.c.b16 %v477, %v476
    %v575 = vpack.c.b16 %v479, %v478
    %v576 = vpack.c.b16 %v481, %v480
    %v577 = vpack.c.b16 %v483, %v482
    %v578 = vpack.c.b16 %v485, %v484
    %v579 = vpack.c.b16 %v487, %v486
    %v580 = vpack.c.b16 %v489, %v488
    %v581 = vpack.c.b16 %v491, %v490
    %v582 = vpack.c.b16 %v493, %v492
    %v583 = vpack.c.b16 %v495, %v494
    %v584 = vpack.c.b16 %v497, %v496
    %v585 = vpack.c.b16 %v499, %v498
    %v586 = vpack.c.b16 %v501, %v500
    %v587 = vpack.c.b16 %v503, %v502
    %v588 = vpack.c.b16 %v505, %v504
    %v589 = vpack.c.b16 %v507, %v506
    %v590 = vpack.c.b16 %v509, %v508
    %v591 = vpack.c.b16 %v511, %v510
    %v592 = vpack.c.b16 %v513, %v512
    %v593 = vpack.c.b16 %v515, %v514
    %v594 = vpack.c.b16 %v517, %v516
    %v595 = vpack.c.b16 %v519, %v518
    %v596 = vpack.c.b16 %v521, %v520
    %v597 = vpack.c.b16 %v523, %v522
    %v598 = vpack.c.b16 %v525, %v524
    %v599 = vpack.c.b16 %v527, %v526
    %v600 = vpack.c.b16 %v529, %v528
    %v601 = vpack.c.b16 %v531, %v530
    %v602 = vpack.c.b16 %v533, %v532
    %v603 = vpack.c.b16 %v535, %v534
    %v604 = vpack.c.b16 %v537, %v536
    %v605 = vpack.c.b16 %v539, %v538
    %v606 = vpack.c.b16 %v541, %v540
    %v607 = vpack.c.b16 %v543, %v542
    %v608 = vpack.c.b16 %v545, %v544
    %v609 = vpack.c.b16 %v547, %v546
    %v610 = vpack.c.b16 %v549, %v548
    %v611 = vpack.c.b16 %v551, %v550
    %v612 = vpack.c.b16 %v553, %v552
    %v613 = vpack.c.b16 %v555, %v554
    %v614 = vpack.c.b16 %v557, %v556
    %v615 = vpack.c.b16 %v559, %v558
    %672 = vmatprep.subr.bf16.mxu0 0
    %673 = vmatpush1.bf16.msra.mxu0 %v560
    %674 = vmatprep.subr.bf16.mxu0 0
    %675 = vmatpush1.bf16.msra.mxu0 %v561
    %676 = vmatprep.subr.bf16.mxu0 0
    %677 = vmatpush1.bf16.msra.mxu0 %v562
    %678 = vmatprep.subr.bf16.mxu0 0
    %679 = vmatpush1.bf16.msra.mxu0 %v563
    %680 = vmatprep.subr.bf16.mxu0 0
    %681 = vmatpush1.bf16.msra.mxu0 %v564
    %682 = vmatprep.subr.bf16.mxu0 0
    %683 = vmatpush1.bf16.msra.mxu0 %v565
    %684 = vmatprep.subr.bf16.mxu0 0
    %685 = vmatpush1.bf16.msra.mxu0 %v566
    %686 = vmatprep.subr.bf16.mxu0 0
    %687 = vmatpush1.bf16.msra.mxu0 %v567
    %688 = vmatprep.subr.bf16.mxu0 0
    %689 = vmatpush1.bf16.msra.mxu0 %v568
    %690 = vmatprep.subr.bf16.mxu0 0
    %691 = vmatpush1.bf16.msra.mxu0 %v569
    %692 = vmatprep.subr.bf16.mxu0 0
    %693 = vmatpush1.bf16.msra.mxu0 %v570
    %694 = vmatprep.subr.bf16.mxu0 0
    %695 = vmatpush1.bf16.msra.mxu0 %v571
    %696 = vmatprep.subr.bf16.mxu0 0
    %697 = vmatpush1.bf16.msra.mxu0 %v572
    %698 = vmatprep.subr.bf16.mxu0 0
    %699 = vmatpush1.bf16.msra.mxu0 %v573
    %700 = vmatprep.subr.bf16.mxu0 0
    %701 = vmatpush1.bf16.msra.mxu0 %v574
    %702 = vmatprep.subr.bf16.mxu0 0
    %703 = vmatpush1.bf16.msra.mxu0 %v575
    %704 = vmatprep.mubr.bf16.mxu0 %v218
    %705 = vmatmul.mubr.bf16.gmra.mrb[0].mxu0 %v217
    %v706 = vpop.f32.mrb[0].mxu0
    %v707 = vadd.f32 0.0, %v706
    %v708 = vpop.f32.mrb[0].mxu0
    %v709 = vpop.f32.mrb[0].mxu0
    %v710 = vpop.f32.mrb[0].mxu0
    %711 = vdwg.mxu0
    %712 = vmatprep.subr.bf16.mxu0 0
    %713 = vmatpush1.bf16.msra.mxu0 %v576
    %714 = vmatprep.subr.bf16.mxu0 0
    %715 = vmatpush1.bf16.msra.mxu0 %v577
    %716 = vmatprep.subr.bf16.mxu0 0
    %717 = vmatpush1.bf16.msra.mxu0 %v578
    %718 = vmatprep.subr.bf16.mxu0 0
    %719 = vmatpush1.bf16.msra.mxu0 %v579
    %720 = vmatprep.subr.bf16.mxu0 0
    %721 = vmatpush1.bf16.msra.mxu0 %v580
    %722 = vmatprep.subr.bf16.mxu0 0
    %723 = vmatpush1.bf16.msra.mxu0 %v581
    %724 = vmatprep.subr.bf16.mxu0 0
    %725 = vmatpush1.bf16.msra.mxu0 %v582
    %726 = vmatprep.subr.bf16.mxu0 0
    %727 = vmatpush1.bf16.msra.mxu0 %v583
    %728 = vmatprep.subr.bf16.mxu0 0
    %729 = vmatpush1.bf16.msra.mxu0 %v584
    %730 = vmatprep.subr.bf16.mxu0 0
    %731 = vmatpush1.bf16.msra.mxu0 %v585
    %732 = vmatprep.subr.bf16.mxu0 0
    %733 = vmatpush1.bf16.msra.mxu0 %v586
    %734 = vmatprep.subr.bf16.mxu0 0
    %735 = vmatpush1.bf16.msra.mxu0 %v587
    %736 = vmatprep.subr.bf16.mxu0 0
    %737 = vmatpush1.bf16.msra.mxu0 %v588
    %738 = vmatprep.subr.bf16.mxu0 0
    %739 = vmatpush1.bf16.msra.mxu0 %v589
    %740 = vmatprep.subr.bf16.mxu0 0
    %741 = vmatpush1.bf16.msra.mxu0 %v590
    %742 = vmatprep.subr.bf16.mxu0 0
    %743 = vmatpush1.bf16.msra.mxu0 %v591
    %744 = vmatprep.mubr.bf16.mxu0 %v220
    %745 = vmatmul.mubr.bf16.gmra.mrb[0].mxu0 %v219
    %v746 = vpop.f32.mrb[0].mxu0
    %v747 = vadd.f32 %v707, %v746
    %v748 = vpop.f32.mrb[0].mxu0
    %v749 = vpop.f32.mrb[0].mxu0
    %v750 = vpop.f32.mrb[0].mxu0
    %751 = vdwg.mxu0
    %752 = vmatprep.subr.bf16.mxu0 0
    %753 = vmatpush1.bf16.msra.mxu0 %v592
    %754 = vmatprep.subr.bf16.mxu0 0
    %755 = vmatpush1.bf16.msra.mxu0 %v593
    %756 = vmatprep.subr.bf16.mxu0 0
    %757 = vmatpush1.bf16.msra.mxu0 %v594
    %758 = vmatprep.subr.bf16.mxu0 0
    %759 = vmatpush1.bf16.msra.mxu0 %v595
    %760 = vmatprep.subr.bf16.mxu0 0
    %761 = vmatpush1.bf16.msra.mxu0 %v596
    %762 = vmatprep.subr.bf16.mxu0 0
    %763 = vmatpush1.bf16.msra.mxu0 %v597
    %764 = vmatprep.subr.bf16.mxu0 0
    %765 = vmatpush1.bf16.msra.mxu0 %v598
    %766 = vmatprep.subr.bf16.mxu0 0
    %767 = vmatpush1.bf16.msra.mxu0 %v599
    %768 = vmatprep.subr.bf16.mxu0 0
    %769 = vmatpush1.bf16.msra.mxu0 %v600
    %770 = vmatprep.subr.bf16.mxu0 0
    %771 = vmatpush1.bf16.msra.mxu0 %v601
    %772 = vmatprep.subr.bf16.mxu0 0
    %773 = vmatpush1.bf16.msra.mxu0 %v602
    %774 = vmatprep.subr.bf16.mxu0 0
    %775 = vmatpush1.bf16.msra.mxu0 %v603
    %776 = vmatprep.subr.bf16.mxu0 0
    %777 = vmatpush1.bf16.msra.mxu0 %v604
    %778 = vmatprep.subr.bf16.mxu0 0
    %779 = vmatpush1.bf16.msra.mxu0 %v605
    %780 = vmatprep.subr.bf16.mxu0 0
    %781 = vmatpush1.bf16.msra.mxu0 %v606
    %782 = vmatprep.subr.bf16.mxu0 0
    %783 = vmatpush1.bf16.msra.mxu0 %v607
    %784 = vmatprep.mubr.bf16.mxu0 %v222
    %785 = vmatmul.mubr.bf16.gmra.mrb[0].mxu0 %v221
    %v786 = vpop.f32.mrb[0].mxu0
    %v787 = vadd.f32 %v747, %v786
    %v788 = vpop.f32.mrb[0].mxu0
    %v789 = vpop.f32.mrb[0].mxu0
    %v790 = vpop.f32.mrb[0].mxu0
    %791 = vdwg.mxu0
    %792 = vmatprep.subr.bf16.mxu0 0
    %793 = vmatpush1.bf16.msra.mxu0 %v608
    %794 = vmatprep.subr.bf16.mxu0 0
    %795 = vmatpush1.bf16.msra.mxu0 %v609
    %796 = vmatprep.subr.bf16.mxu0 0
    %797 = vmatpush1.bf16.msra.mxu0 %v610
    %798 = vmatprep.subr.bf16.mxu0 0
    %799 = vmatpush1.bf16.msra.mxu0 %v611
    %800 = vmatprep.subr.bf16.mxu0 0
    %801 = vmatpush1.bf16.msra.mxu0 %v612
    %802 = vmatprep.subr.bf16.mxu0 0
    %803 = vmatpush1.bf16.msra.mxu0 %v613
    %804 = vmatprep.subr.bf16.mxu0 0
    %805 = vmatpush1.bf16.msra.mxu0 %v614
    %806 = vmatprep.subr.bf16.mxu0 0
    %807 = vmatpush1.bf16.msra.mxu0 %v615
    %808 = vmatprep.subr.bf16.mxu0 0
    %809 = vmatpush1.bf16.msra.mxu0 0
    %810 = vmatprep.subr.bf16.mxu0 0
    %811 = vmatpush1.bf16.msra.mxu0 0
    %812 = vmatprep.subr.bf16.mxu0 0
    %813 = vmatpush1.bf16.msra.mxu0 0
    %814 = vmatprep.subr.bf16.mxu0 0
    %815 = vmatpush1.bf16.msra.mxu0 0
    %816 = vmatprep.subr.bf16.mxu0 0
    %817 = vmatpush1.bf16.msra.mxu0 0
    %818 = vmatprep.subr.bf16.mxu0 0
    %819 = vmatpush1.bf16.msra.mxu0 0
    %820 = vmatprep.subr.bf16.mxu0 0
    %821 = vmatpush1.bf16.msra.mxu0 0
    %822 = vmatprep.subr.bf16.mxu0 0
    %823 = vmatpush1.bf16.msra.mxu0 0
    %824 = vmatprep.mubr.bf16.mxu0 0
    %825 = vmatmul.mubr.bf16.gmra.mrb[0].mxu0 %v223
    %v826 = vpop.f32.mrb[0].mxu0
    %v827 = vadd.f32 %v787, %v826
    %v828 = vpop.f32.mrb[0].mxu0
    %v829 = vpop.f32.mrb[0].mxu0
    %v830 = vpop.f32.mrb[0].mxu0
    %831 = vdwg.mxu0
    %v832 = vadd.f32 %v174, %v827
    %vm833 = vcmask 254976
    %834 = vst.msk [vmem:[#allocation2] sm:$0x3] %vm833, %v832
    // Predicated region
    $region26: #{conv_dense_block.3} parent=1 // pred_check
      _
    $region27: #{conv_dense_block.3} parent=1 // pred_check_branch
      %836 = sbr.rel (0) target = $region29
    $region28: #{conv_dense_block.3} parent=1 // pred_region
      %s838 = ssub.s32 32, 32
      %839 = vsyncadd [#allocation3], %s838
      %s841 = sshll.u32 [#allocation2], 4
      %s842 = int_to_ptr.vmem [resolvable:$true] %s841
      %844 = dma.vmem_to_hbm [thread:$0]  %s842, 32, %s5, [#allocation3]
    $region29: #{conv_dense_block.3} parent=1 // pred_fallthru
      _
    // Predicated region
    $region30: #{conv_dense_block.3} parent=1 // pred_check
      _
    $region31: #{conv_dense_block.3} parent=1 // pred_check_branch
      %846 = sbr.rel (0) target = $region33
    $region32: #{conv_dense_block.3} parent=1 // pred_region
      %847 = dma.done [#allocation3], 32
    $region33: #{conv_dense_block.3} parent=1 // pred_fallthru
      _
    %848 = vsyncpa [#allocation3], 1

</llo_original>
